<compile_context>
chip_gen: v7x
topology: tpu7x:2x2x1
jax: 0.10.0
libtpu: 0.0.40
codegen_flags: <defaults>
</compile_context>

<pallas_src>
import numpy as np
import jax
import jax.numpy as jnp
from jax.experimental import pallas as pl
from jax.experimental.pallas import tpu as pltpu

# ------------------------- demo-sized DenseGridNet config -------------------------
RES_FINEST = (64, 64)       # small stand-in for the default [512, 512]
RES_COARSEST = (16, 16)
NUM_LEVELS = 3
FEAT_LEN = 4
MLP_HIDDENS = (64, 64)
OUT_DIM = 3
EMBED_DIM = 1 + FEAT_LEN * NUM_LEVELS            # 13 (original MLP input width)
PACKED_DIM = 1 + NUM_LEVELS * 4 * FEAT_LEN       # 49 (idf + 4 weighted corners/level)

# torch.linspace(finest, coarsest, num_levels).int()  (truncation)
RES_X = np.linspace(RES_FINEST[0], RES_COARSEST[0], NUM_LEVELS).astype(np.int32)
RES_Y = np.linspace(RES_FINEST[1], RES_COARSEST[1], NUM_LEVELS).astype(np.int32)

TILE_N = 512                # samples per grid step (multiple of 8; fits VMEM easily)


# --------------------------------- parameters --------------------------------------
def init_params(key):
    keys = jax.random.split(key, NUM_LEVELS + 3)
    emb = []
    for lvl in range(NUM_LEVELS):
        vocab = int((RES_X[lvl] + 1) * (RES_Y[lvl] + 1))
        emb.append(jax.random.uniform(keys[lvl], (vocab, FEAT_LEN),
                                      minval=-1e-4, maxval=1e-4, dtype=jnp.float32))

    def linear(k, fan_in, fan_out):
        kw, kb = jax.random.split(k)
        bound = 1.0 / np.sqrt(fan_in)
        w = jax.random.uniform(kw, (fan_in, fan_out), minval=-bound, maxval=bound,
                               dtype=jnp.float32)
        b = jax.random.uniform(kb, (fan_out,), minval=-bound, maxval=bound,
                               dtype=jnp.float32)
        return w, b

    w1, b1 = linear(keys[NUM_LEVELS + 0], EMBED_DIM, MLP_HIDDENS[0])
    w2, b2 = linear(keys[NUM_LEVELS + 1], MLP_HIDDENS[0], MLP_HIDDENS[1])
    w3, b3 = linear(keys[NUM_LEVELS + 2], MLP_HIDDENS[1], OUT_DIM)
    return dict(emb=emb, w1=w1, b1=b1, w2=w2, b2=b2, w3=w3, b3=b3)


# ------------------- JAX glue: gather + bilinear-weighted packing ------------------
def _level_corners(uv, emb_table, lvl):
    """Reproduces get_vert_ids / get_embedding_idx + embedding lookup for one level."""
    rx = int(RES_X[lvl])
    ry = int(RES_Y[lvl])
    ux = uv[:, 0] * rx
    uy = uv[:, 1] * ry
    x0 = ux.astype(jnp.int32)                    # torch .int() truncation
    x1 = jnp.minimum(x0 + 1, rx)                 # x1[x1 >= rx] = rx
    y0 = uy.astype(jnp.int32)
    y1 = jnp.minimum(y0 + 1, ry)
    wx = (ux - x0.astype(jnp.float32))[:, None]
    wy = (uy - y0.astype(jnp.float32))[:, None]
    # get_embedding_idx: idx = y * resolution_x + x  (faithful to the reference;
    # note the stride is rx, not rx+1 — flagged upstream, kept for parity).
    v00 = emb_table[y0 * rx + x0]
    v10 = emb_table[y0 * rx + x1]
    v01 = emb_table[y1 * rx + x0]
    v11 = emb_table[y1 * rx + x1]
    return v00, v10, v01, v11, wx, wy


def build_weighted_slab(idf, uv, emb_tables):
    """Packs [idf | w_c * corner_c for every (level, corner, feat)] -> (N, 49).

    The bilinear weights are applied here (fused by XLA with the gather output);
    the per-corner summation happens inside the kernel's first matmul.
    """
    pieces = [idf]
    for lvl in range(NUM_LEVELS):
        v00, v10, v01, v11, wx, wy = _level_corners(uv, emb_tables[lvl], lvl)
        pieces += [v00 * ((1.0 - wx) * (1.0 - wy)),
                   v10 * (wx * (1.0 - wy)),
                   v01 * ((1.0 - wx) * wy),
                   v11 * (wx * wy)]
    return jnp.concatenate(pieces, axis=1)       # (N, PACKED_DIM)


def pack_first_layer_weight(w1):
    """(13, H1) -> (49, H1): grid-feature rows replicated once per corner."""
    h1 = w1.shape[1]
    w1_id = w1[:1]                                              # (1, H1)
    w1_grid = w1[1:].reshape(NUM_LEVELS, FEAT_LEN, h1)          # (L, F, H1)
    w1_grid = jnp.tile(w1_grid[:, None], (1, 4, 1, 1))          # (L, 4, F, H1)
    w1_grid = w1_grid.reshape(NUM_LEVELS * 4 * FEAT_LEN, h1)    # (48, H1)
    return jnp.concatenate([w1_id, w1_grid], axis=0)            # (49, H1)


# ---------------------------------- Pallas kernel -----------------------------------
def _dense_grid_mlp_kernel(slab_ref, w1_ref, b1_ref, w2_ref, b2_ref,
                           w3_ref, b3_ref, out_ref):
    # Layer 1: single K=49 matmul performs bilinear corner-sum + Linear fused.
    h = jnp.dot(slab_ref[...], w1_ref[...],
                preferred_element_type=jnp.float32) + b1_ref[...]
    h = jnp.maximum(h, 0.0)                                     # ReLU
    h = jnp.dot(h, w2_ref[...], preferred_element_type=jnp.float32) + b2_ref[...]
    h = jnp.maximum(h, 0.0)                                     # ReLU
    out_ref[...] = (jnp.dot(h, w3_ref[...], preferred_element_type=jnp.float32)
                    + b3_ref[...])                              # (TILE_N, 3)


def dense_grid_net_forward(x, params, tile_n=TILE_N):
    """x: (N, 3) float32 -> (N, 3) float32."""
    N = x.shape[0]
    idf = x[:, :1]
    uv = x[:, 1:3]
    slab = build_weighted_slab(idf, uv, params["emb"])           # (N, 49)

    # Pad samples so the grid divides evenly (zeros are harmless / discarded).
    n_pad = (-N) % tile_n
    if n_pad:
        slab = jnp.pad(slab, ((0, n_pad), (0, 0)))
    n_total = slab.shape[0]

    H1, H2 = MLP_HIDDENS
    w1p = pack_first_layer_weight(params["w1"])                  # (49, H1)
    b1 = params["b1"].reshape(1, H1)
    b2 = params["b2"].reshape(1, H2)
    b3 = params["b3"].reshape(1, OUT_DIM)

    grid = (n_total // tile_n,)
    in_specs = [
        pl.BlockSpec((tile_n, PACKED_DIM), lambda i: (i, 0)),    # packed slab
        pl.BlockSpec((PACKED_DIM, H1), lambda i: (0, 0)),        # W1 packed
        pl.BlockSpec((1, H1), lambda i: (0, 0)),                 # b1
        pl.BlockSpec((H1, H2), lambda i: (0, 0)),                # W2
        pl.BlockSpec((1, H2), lambda i: (0, 0)),                 # b2
        pl.BlockSpec((H2, OUT_DIM), lambda i: (0, 0)),           # W3
        pl.BlockSpec((1, OUT_DIM), lambda i: (0, 0)),            # b3
    ]
    out_specs = pl.BlockSpec((tile_n, OUT_DIM), lambda i: (i, 0))

    out = pl.pallas_call(
        _dense_grid_mlp_kernel,
        out_shape=jax.ShapeDtypeStruct((n_total, OUT_DIM), jnp.float32),
        grid=grid,
        in_specs=in_specs,
        out_specs=out_specs,
        compiler_params=pltpu.CompilerParams(dimension_semantics=("parallel",)),
    )(slab, w1p, b1, params["w2"], b2, params["w3"], b3)
    return out[:N]


# ----------------------------- pure-JAX reference ----------------------------------
def reference_forward(x, params):
    idf = x[:, :1]
    uv = x[:, 1:3]
    feats = [idf]
    for lvl in range(NUM_LEVELS):
        v00, v10, v01, v11, wx, wy = _level_corners(uv, params["emb"][lvl], lvl)
        fup = v00 * (1.0 - wx) + v10 * wx
        fdn = v01 * (1.0 - wx) + v11 * wx
        feats.append(fup * (1.0 - wy) + fdn * wy)
    h = jnp.concatenate(feats, axis=1)                           # (N, 13)
    h = jnp.maximum(h @ params["w1"] + params["b1"], 0.0)
    h = jnp.maximum(h @ params["w2"] + params["b2"], 0.0)
    return h @ params["w3"] + params["b3"]


# -------------------------------------- main ---------------------------------------
if __name__ == "__main__":
    N = 2048                                        # grid of 4 tiles (even, >= 2)
    key = jax.random.PRNGKey(0)
    k_idf, k_uv, k_params = jax.random.split(key, 3)
    idf = jax.random.uniform(k_idf, (N, 1), dtype=jnp.float32)
    uv = jax.random.uniform(k_uv, (N, 2), dtype=jnp.float32)     # uv in [0, 1)
    x = jnp.concatenate([idf, uv], axis=1)                       # (N, 3)

    params = init_params(k_params)

    out = jax.block_until_ready(dense_grid_net_forward(x, params))
    assert out.shape == (N, OUT_DIM)
    assert bool(jnp.all(jnp.isfinite(out)))

    ref = jax.block_until_ready(reference_forward(x, params))
    assert bool(jnp.allclose(out, ref, rtol=1e-3, atol=1e-3)), \
        f"max abs diff {float(jnp.max(jnp.abs(out - ref)))}"

    print("KERNEL_OK")
</pallas_src>

<mosaic_0001>
module attributes {stable_mosaic.version = 11 : i64} {
  func.func @_dense_grid_mlp_kernel(%arg0: i32, %arg1: memref<512x49xf32, #tpu.memory_space<vmem>>, %arg2: memref<49x64xf32, #tpu.memory_space<vmem>>, %arg3: memref<1x64xf32, #tpu.memory_space<vmem>>, %arg4: memref<64x64xf32, #tpu.memory_space<vmem>>, %arg5: memref<1x64xf32, #tpu.memory_space<vmem>>, %arg6: memref<64x3xf32, #tpu.memory_space<vmem>>, %arg7: memref<1x3xf32, #tpu.memory_space<vmem>>, %arg8: memref<512x3xf32, #tpu.memory_space<vmem>>) attributes {dimension_semantics = [#tpu.dimension_semantics<parallel>], iteration_bounds = array<i64: 4>, scalar_prefetch = 0 : i64, scratch_operands = 0 : i64, tpu.core_type = #tpu.core_type<tc>, window_params = [{transform_indices = @transform_0, window_bounds = array<i64: 512, 49>}, {pipeline_mode = #tpu.pipeline_mode<synchronous>, transform_indices = @transform_1, window_bounds = array<i64: 49, 64>}, {pipeline_mode = #tpu.pipeline_mode<synchronous>, transform_indices = @transform_2, window_bounds = array<i64: 1, 64>}, {pipeline_mode = #tpu.pipeline_mode<synchronous>, transform_indices = @transform_3, window_bounds = array<i64: 64, 64>}, {pipeline_mode = #tpu.pipeline_mode<synchronous>, transform_indices = @transform_4, window_bounds = array<i64: 1, 64>}, {pipeline_mode = #tpu.pipeline_mode<synchronous>, transform_indices = @transform_5, window_bounds = array<i64: 64, 3>}, {pipeline_mode = #tpu.pipeline_mode<synchronous>, transform_indices = @transform_6, window_bounds = array<i64: 1, 3>}, {transform_indices = @transform_7, window_bounds = array<i64: 512, 3>}]} {
    %c0 = arith.constant 0 : index
    %c0_0 = arith.constant 0 : index
    %0 = vector.load %arg1[%c0, %c0_0] : memref<512x49xf32, #tpu.memory_space<vmem>>, vector<512x49xf32>
    %c0_1 = arith.constant 0 : index
    %c0_2 = arith.constant 0 : index
    %1 = vector.load %arg2[%c0_1, %c0_2] : memref<49x64xf32, #tpu.memory_space<vmem>>, vector<49x64xf32>
    %cst = arith.constant dense<0.000000e+00> : vector<512x64xf32>
    %2 = tpu.matmul %0, %1, %cst {dimension_numbers = #tpu.dot_dimension_numbers<[1], [0], [0], [1], [0, 0, 1, 1], [], []>} : vector<512x49xf32>, vector<49x64xf32>, vector<512x64xf32> -> vector<512x64xf32>
    %c0_3 = arith.constant 0 : index
    %c0_4 = arith.constant 0 : index
    %3 = vector.load %arg3[%c0_3, %c0_4] : memref<1x64xf32, #tpu.memory_space<vmem>>, vector<1x64xf32>
    %4 = vector.broadcast %3 : vector<1x64xf32> to vector<512x64xf32>
    %5 = arith.addf %2, %4 : vector<512x64xf32>
    %cst_5 = arith.constant 0.000000e+00 : f32
    %6 = vector.broadcast %cst_5 : f32 to vector<512x64xf32>
    %7 = arith.maximumf %5, %6 : vector<512x64xf32>
    %c0_6 = arith.constant 0 : index
    %c0_7 = arith.constant 0 : index
    %8 = vector.load %arg4[%c0_6, %c0_7] : memref<64x64xf32, #tpu.memory_space<vmem>>, vector<64x64xf32>
    %cst_8 = arith.constant dense<0.000000e+00> : vector<512x64xf32>
    %9 = tpu.matmul %7, %8, %cst_8 {dimension_numbers = #tpu.dot_dimension_numbers<[1], [0], [0], [1], [0, 0, 1, 1], [], []>} : vector<512x64xf32>, vector<64x64xf32>, vector<512x64xf32> -> vector<512x64xf32>
    %c0_9 = arith.constant 0 : index
    %c0_10 = arith.constant 0 : index
    %10 = vector.load %arg5[%c0_9, %c0_10] : memref<1x64xf32, #tpu.memory_space<vmem>>, vector<1x64xf32>
    %11 = vector.broadcast %10 : vector<1x64xf32> to vector<512x64xf32>
    %12 = arith.addf %9, %11 : vector<512x64xf32>
    %cst_11 = arith.constant 0.000000e+00 : f32
    %13 = vector.broadcast %cst_11 : f32 to vector<512x64xf32>
    %14 = arith.maximumf %12, %13 : vector<512x64xf32>
    %c0_12 = arith.constant 0 : index
    %c0_13 = arith.constant 0 : index
    %15 = vector.load %arg6[%c0_12, %c0_13] : memref<64x3xf32, #tpu.memory_space<vmem>>, vector<64x3xf32>
    %cst_14 = arith.constant dense<0.000000e+00> : vector<512x3xf32>
    %16 = tpu.matmul %14, %15, %cst_14 {dimension_numbers = #tpu.dot_dimension_numbers<[1], [0], [0], [1], [0, 0, 1, 1], [], []>} : vector<512x64xf32>, vector<64x3xf32>, vector<512x3xf32> -> vector<512x3xf32>
    %c0_15 = arith.constant 0 : index
    %c0_16 = arith.constant 0 : index
    %17 = vector.load %arg7[%c0_15, %c0_16] : memref<1x3xf32, #tpu.memory_space<vmem>>, vector<1x3xf32>
    %18 = vector.broadcast %17 : vector<1x3xf32> to vector<512x3xf32>
    %19 = arith.addf %16, %18 : vector<512x3xf32>
    %c0_17 = arith.constant 0 : index
    %c0_18 = arith.constant 0 : index
    %20 = vector.load %arg8[%c0_17, %c0_18] : memref<512x3xf32, #tpu.memory_space<vmem>>, vector<512x3xf32>
    tpu.vector_store %arg8[%c0_17, %c0_18], %19 {strides = array<i32>} : memref<512x3xf32, #tpu.memory_space<vmem>>, vector<512x3xf32>,
    return
  }
  func.func @transform_0(%arg0: i32) -> (i32, i32) {
    %c0_i32 = arith.constant 0 : i32
    %c0_i32_0 = arith.constant 0 : i32
    return %arg0, %c0_i32 : i32, i32
  }
  func.func @transform_1(%arg0: i32) -> (i32, i32) {
    %c0_i32 = arith.constant 0 : i32
    %c0_i32_0 = arith.constant 0 : i32
    %c0_i32_1 = arith.constant 0 : i32
    return %c0_i32, %c0_i32_0 : i32, i32
  }
  func.func @transform_2(%arg0: i32) -> (i32, i32) {
    %c0_i32 = arith.constant 0 : i32
    %c0_i32_0 = arith.constant 0 : i32
    %c0_i32_1 = arith.constant 0 : i32
    return %c0_i32, %c0_i32_0 : i32, i32
  }
  func.func @transform_3(%arg0: i32) -> (i32, i32) {
    %c0_i32 = arith.constant 0 : i32
    %c0_i32_0 = arith.constant 0 : i32
    %c0_i32_1 = arith.constant 0 : i32
    return %c0_i32, %c0_i32_0 : i32, i32
  }
  func.func @transform_4(%arg0: i32) -> (i32, i32) {
    %c0_i32 = arith.constant 0 : i32
    %c0_i32_0 = arith.constant 0 : i32
    %c0_i32_1 = arith.constant 0 : i32
    return %c0_i32, %c0_i32_0 : i32, i32
  }
  func.func @transform_5(%arg0: i32) -> (i32, i32) {
    %c0_i32 = arith.constant 0 : i32
    %c0_i32_0 = arith.constant 0 : i32
    %c0_i32_1 = arith.constant 0 : i32
    return %c0_i32, %c0_i32_0 : i32, i32
  }
  func.func @transform_6(%arg0: i32) -> (i32, i32) {
    %c0_i32 = arith.constant 0 : i32
    %c0_i32_0 = arith.constant 0 : i32
    %c0_i32_1 = arith.constant 0 : i32
    return %c0_i32, %c0_i32_0 : i32, i32
  }
  func.func @transform_7(%arg0: i32) -> (i32, i32) {
    %c0_i32 = arith.constant 0 : i32
    %c0_i32_0 = arith.constant 0 : i32
    return %arg0, %c0_i32 : i32, i32
  }
}

</mosaic_0001>

<llo_original>
// kernel: tpu_custom_call.1
$region0: #{tpu_custom_call.1}
  #allocation0 [shape = 'u32[]', space=smem, size = 0x4, offset = 0x4, fixed_abs, tag = 'smem constant byte address 0x4 - core index']
  #allocation1 [shape = 'u32[144,128]{1,0:T(1,128)}', space=vmem, size = 0x12000, scoped, tag = 'internal scratch']
  %s0 = inlined_call_operand.vmem [shape: f32[2048,49], index: 0, kind: input, shape index: {}]
  %s1 = inlined_call_operand.vmem [shape: f32[49,64], index: 1, kind: input, shape index: {}]
  %s2 = inlined_call_operand.vmem [shape: f32[1,64], index: 2, kind: input, shape index: {}]
  %s3 = inlined_call_operand.vmem [shape: f32[64,64], index: 3, kind: input, shape index: {}]
  %s4 = inlined_call_operand.vmem [shape: f32[1,64], index: 4, kind: input, shape index: {}]
  %s5 = inlined_call_operand.vmem [shape: f32[64,3], index: 5, kind: input, shape index: {}]
  %s6 = inlined_call_operand.vmem [shape: f32[1,3], index: 6, kind: input, shape index: {}]
  %s7 = inlined_call_operand.vmem [shape: f32[2048,3], index: 7, kind: output, shape index: {}]
  %s8 = sld [smem:[#allocation0]]
  $region61: #{tpu_custom_call.1} parent=0
    _
  %s10 = ssub.s32 1, %s8
  %s11 = scalar_select 0, %s10, %s8
  loop: start=0, step=1, limit=6
  $region2: #{tpu_custom_call.1} parent=0 // loop_pre_header
    _
  $region3: #{tpu_custom_call.1} parent=0 // loop_header
    %s13 = sphi 0, %s17
    %p14 = scmp.ge.s32.totalorder %s13, 6
    %s23 = sphi 0, %s25
    %s26 = sphi 0, %s23
    %s27 = sphi 0, %s26
    %s43 = sphi 0, %s27
    %s47 = sphi 0, %s47
    %s49 = sphi 0, %s47
    %s50 = sphi 0, %s49
    %s64 = sphi 0, %s50
    %s68 = sphi 0, %s68
    %s70 = sphi 0, %s68
    %s71 = sphi 0, %s70
    %s85 = sphi 0, %s71
    %s89 = sphi 0, %s89
    %s91 = sphi 0, %s89
    %s92 = sphi 0, %s91
    %s106 = sphi 0, %s92
    %s110 = sphi 0, %s110
    %s112 = sphi 0, %s110
    %s113 = sphi 0, %s112
    %s127 = sphi 0, %s113
    %s131 = sphi 0, %s131
    %s133 = sphi 0, %s131
    %s134 = sphi 0, %s133
    %s148 = sphi 0, %s134
    %s152 = sphi 0, %s152
    %s154 = sphi 0, %s152
    %s155 = sphi 0, %s154
    %s169 = sphi 0, %s155
    %s175 = sphi 0, %s177
    %s178 = sphi 0, %s175
    %s179 = sphi 0, %s178
    %s195 = sphi 0, %s179
  $region4: #{tpu_custom_call.1} parent=0 // loop_header_branch
    %16 = sbr.rel (%p14) target = $region8
  $region5: #{tpu_custom_call.1} parent=0 // loop_body
    %s18 = ssub.s32 %s13, 1
    %s19 = ssub.s32 %s13, 2
    %s20 = sadd.s32 %s13, 1
    %s21 = ssub.s32 %s13, %s20
    %p22 = scmp.eq.s32.totalorder %s21, 0
    %s24 = sadd.s32 %s23, 1
    %s25 = scalar_select %p22, %s23, %s24
    %p28 = pneg %p22
    %p29 = scmp.eq.s32.totalorder %s13, 3
    %p30 = por %p28, %p29
    %p31 = scmp.ne.s32.totalorder %s23, %s26
    %p32 = scmp.eq.s32.totalorder %s13, 0
    %p33 = por %p31, %p32
    %p34 = scmp.ne.s32.totalorder %s23, %s26
    %p35 = scmp.eq.s32.totalorder %s18, 3
    %p36 = por %p34, %p35
    %p37 = scmp.ne.s32.totalorder %s26, %s27
    %p38 = scmp.eq.s32.totalorder %s18, 0
    %p39 = por %p37, %p38
    %p40 = scmp.ne.s32.totalorder %s26, %s27
    %p41 = scmp.eq.s32.totalorder %s19, 3
    %p42 = por %p40, %p41
    %p44 = scmp.ne.s32.totalorder %s27, %s43
    %p45 = scmp.eq.s32.totalorder %s19, 0
    %p46 = por %p44, %p45
    %s48 = sadd.s32 %s47, 1
    %p51 = scmp.eq.s32.totalorder %s13, 3
    %p52 = scmp.ne.s32.totalorder %s47, %s49
    %p53 = scmp.eq.s32.totalorder %s13, 0
    %p54 = por %p52, %p53
    %p55 = scmp.ne.s32.totalorder %s47, %s49
    %p56 = scmp.eq.s32.totalorder %s18, 3
    %p57 = por %p55, %p56
    %p58 = scmp.ne.s32.totalorder %s49, %s50
    %p59 = scmp.eq.s32.totalorder %s18, 0
    %p60 = por %p58, %p59
    %p61 = scmp.ne.s32.totalorder %s49, %s50
    %p62 = scmp.eq.s32.totalorder %s19, 3
    %p63 = por %p61, %p62
    %p65 = scmp.ne.s32.totalorder %s50, %s64
    %p66 = scmp.eq.s32.totalorder %s19, 0
    %p67 = por %p65, %p66
    %s69 = sadd.s32 %s68, 1
    %p72 = scmp.eq.s32.totalorder %s13, 3
    %p73 = scmp.ne.s32.totalorder %s68, %s70
    %p74 = scmp.eq.s32.totalorder %s13, 0
    %p75 = por %p73, %p74
    %p76 = scmp.ne.s32.totalorder %s68, %s70
    %p77 = scmp.eq.s32.totalorder %s18, 3
    %p78 = por %p76, %p77
    %p79 = scmp.ne.s32.totalorder %s70, %s71
    %p80 = scmp.eq.s32.totalorder %s18, 0
    %p81 = por %p79, %p80
    %p82 = scmp.ne.s32.totalorder %s70, %s71
    %p83 = scmp.eq.s32.totalorder %s19, 3
    %p84 = por %p82, %p83
    %p86 = scmp.ne.s32.totalorder %s71, %s85
    %p87 = scmp.eq.s32.totalorder %s19, 0
    %p88 = por %p86, %p87
    %s90 = sadd.s32 %s89, 1
    %p93 = scmp.eq.s32.totalorder %s13, 3
    %p94 = scmp.ne.s32.totalorder %s89, %s91
    %p95 = scmp.eq.s32.totalorder %s13, 0
    %p96 = por %p94, %p95
    %p97 = scmp.ne.s32.totalorder %s89, %s91
    %p98 = scmp.eq.s32.totalorder %s18, 3
    %p99 = por %p97, %p98
    %p100 = scmp.ne.s32.totalorder %s91, %s92
    %p101 = scmp.eq.s32.totalorder %s18, 0
    %p102 = por %p100, %p101
    %p103 = scmp.ne.s32.totalorder %s91, %s92
    %p104 = scmp.eq.s32.totalorder %s19, 3
    %p105 = por %p103, %p104
    %p107 = scmp.ne.s32.totalorder %s92, %s106
    %p108 = scmp.eq.s32.totalorder %s19, 0
    %p109 = por %p107, %p108
    %s111 = sadd.s32 %s110, 1
    %p114 = scmp.eq.s32.totalorder %s13, 3
    %p115 = scmp.ne.s32.totalorder %s110, %s112
    %p116 = scmp.eq.s32.totalorder %s13, 0
    %p117 = por %p115, %p116
    %p118 = scmp.ne.s32.totalorder %s110, %s112
    %p119 = scmp.eq.s32.totalorder %s18, 3
    %p120 = por %p118, %p119
    %p121 = scmp.ne.s32.totalorder %s112, %s113
    %p122 = scmp.eq.s32.totalorder %s18, 0
    %p123 = por %p121, %p122
    %p124 = scmp.ne.s32.totalorder %s112, %s113
    %p125 = scmp.eq.s32.totalorder %s19, 3
    %p126 = por %p124, %p125
    %p128 = scmp.ne.s32.totalorder %s113, %s127
    %p129 = scmp.eq.s32.totalorder %s19, 0
    %p130 = por %p128, %p129
    %s132 = sadd.s32 %s131, 1
    %p135 = scmp.eq.s32.totalorder %s13, 3
    %p136 = scmp.ne.s32.totalorder %s131, %s133
    %p137 = scmp.eq.s32.totalorder %s13, 0
    %p138 = por %p136, %p137
    %p139 = scmp.ne.s32.totalorder %s131, %s133
    %p140 = scmp.eq.s32.totalorder %s18, 3
    %p141 = por %p139, %p140
    %p142 = scmp.ne.s32.totalorder %s133, %s134
    %p143 = scmp.eq.s32.totalorder %s18, 0
    %p144 = por %p142, %p143
    %p145 = scmp.ne.s32.totalorder %s133, %s134
    %p146 = scmp.eq.s32.totalorder %s19, 3
    %p147 = por %p145, %p146
    %p149 = scmp.ne.s32.totalorder %s134, %s148
    %p150 = scmp.eq.s32.totalorder %s19, 0
    %p151 = por %p149, %p150
    %s153 = sadd.s32 %s152, 1
    %p156 = scmp.eq.s32.totalorder %s13, 3
    %p157 = scmp.ne.s32.totalorder %s152, %s154
    %p158 = scmp.eq.s32.totalorder %s13, 0
    %p159 = por %p157, %p158
    %p160 = scmp.ne.s32.totalorder %s152, %s154
    %p161 = scmp.eq.s32.totalorder %s18, 3
    %p162 = por %p160, %p161
    %p163 = scmp.ne.s32.totalorder %s154, %s155
    %p164 = scmp.eq.s32.totalorder %s18, 0
    %p165 = por %p163, %p164
    %p166 = scmp.ne.s32.totalorder %s154, %s155
    %p167 = scmp.eq.s32.totalorder %s19, 3
    %p168 = por %p166, %p167
    %p170 = scmp.ne.s32.totalorder %s155, %s169
    %p171 = scmp.eq.s32.totalorder %s19, 0
    %p172 = por %p170, %p171
    %s173 = ssub.s32 %s13, %s20
    %p174 = scmp.eq.s32.totalorder %s173, 0
    %s176 = sadd.s32 %s175, 1
    %s177 = scalar_select %p174, %s175, %s176
    %p180 = pneg %p174
    %p181 = scmp.eq.s32.totalorder %s13, 3
    %p182 = por %p180, %p181
    %p183 = scmp.ne.s32.totalorder %s175, %s178
    %p184 = scmp.eq.s32.totalorder %s13, 0
    %p185 = por %p183, %p184
    %p186 = scmp.ne.s32.totalorder %s175, %s178
    %p187 = scmp.eq.s32.totalorder %s18, 3
    %p188 = por %p186, %p187
    %p189 = scmp.ne.s32.totalorder %s178, %s179
    %p190 = scmp.eq.s32.totalorder %s18, 0
    %p191 = por %p189, %p190
    %p192 = scmp.ne.s32.totalorder %s178, %s179
    %p193 = scmp.eq.s32.totalorder %s19, 3
    %p194 = por %p192, %p193
    %p196 = scmp.ne.s32.totalorder %s179, %s195
    %p197 = scmp.eq.s32.totalorder %s19, 0
    %p198 = por %p196, %p197
    %p199 = scmp.le.s32.totalorder 1, %s13
    %p200 = scmp.lt.s32.totalorder %s13, 5
    %p201 = pnand %p199, %p200
    %p202 = pneg %p201
    // Predicated region
    $region9: #{tpu_custom_call.1} parent=5 // pred_check
      _
    $region10: #{tpu_custom_call.1} parent=5 // pred_check_branch
      %204 = sbr.rel (%p201) target = $region12
    $region11: #{tpu_custom_call.1} parent=5 // pred_region
      %s205 = ssub.s32 %s13, 1
      // Predicated region
      $region13: #{tpu_custom_call.1} parent=11 // pred_check
        %p206 = pneg %p60
      $region14: #{tpu_custom_call.1} parent=11 // pred_check_branch
        %208 = sbr.rel (%p206) target = $region16
      $region15: #{tpu_custom_call.1} parent=11 // pred_region
        _
      $region16: #{tpu_custom_call.1} parent=11 // pred_fallthru
        _
      // Predicated region
      $region17: #{tpu_custom_call.1} parent=11 // pred_check
        %p209 = pneg %p81
      $region18: #{tpu_custom_call.1} parent=11 // pred_check_branch
        %211 = sbr.rel (%p209) target = $region20
      $region19: #{tpu_custom_call.1} parent=11 // pred_region
        _
      $region20: #{tpu_custom_call.1} parent=11 // pred_fallthru
        _
      // Predicated region
      $region21: #{tpu_custom_call.1} parent=11 // pred_check
        %p212 = pneg %p102
      $region22: #{tpu_custom_call.1} parent=11 // pred_check_branch
        %214 = sbr.rel (%p212) target = $region24
      $region23: #{tpu_custom_call.1} parent=11 // pred_region
        _
      $region24: #{tpu_custom_call.1} parent=11 // pred_fallthru
        _
      // Predicated region
      $region25: #{tpu_custom_call.1} parent=11 // pred_check
        %p215 = pneg %p123
      $region26: #{tpu_custom_call.1} parent=11 // pred_check_branch
        %217 = sbr.rel (%p215) target = $region28
      $region27: #{tpu_custom_call.1} parent=11 // pred_region
        _
      $region28: #{tpu_custom_call.1} parent=11 // pred_fallthru
        _
      // Predicated region
      $region29: #{tpu_custom_call.1} parent=11 // pred_check
        %p218 = pneg %p144
      $region30: #{tpu_custom_call.1} parent=11 // pred_check_branch
        %220 = sbr.rel (%p218) target = $region32
      $region31: #{tpu_custom_call.1} parent=11 // pred_region
        _
      $region32: #{tpu_custom_call.1} parent=11 // pred_fallthru
        _
      // Predicated region
      $region33: #{tpu_custom_call.1} parent=11 // pred_check
        %p221 = pneg %p165
      $region34: #{tpu_custom_call.1} parent=11 // pred_check_branch
        %223 = sbr.rel (%p221) target = $region36
      $region35: #{tpu_custom_call.1} parent=11 // pred_region
        _
      $region36: #{tpu_custom_call.1} parent=11 // pred_fallthru
        _
    $region12: #{tpu_custom_call.1} parent=5 // pred_fallthru
      _
    %p224 = scmp.lt.s32.totalorder %s13, 4
    // Predicated region
    $region37: #{tpu_custom_call.1} parent=5 // pred_check
      %p225 = pneg %p224
    $region38: #{tpu_custom_call.1} parent=5 // pred_check_branch
      %227 = sbr.rel (%p225) target = $region40
    $region39: #{tpu_custom_call.1} parent=5 // pred_region
      // Predicated region
      $region41: #{tpu_custom_call.1} parent=39 // pred_check
        %p228 = pneg %p33
      $region42: #{tpu_custom_call.1} parent=39 // pred_check_branch
        %230 = sbr.rel (%p228) target = $region44
      $region43: #{tpu_custom_call.1} parent=39 // pred_region
        %s231 = smul.u32 64, %s13
        %p232 = scmp.lt.s32.totalorder %s231, 255
        %s233 = scalar_select %p232, %s231, 255
        %s234 = smul.addr %s233, 8
        %s235 = scalar_lea.vmem %s0, %s234
        %s236 = smul.u32 64, %s13
      $region44: #{tpu_custom_call.1} parent=39 // pred_fallthru
        _
    $region40: #{tpu_custom_call.1} parent=5 // pred_fallthru
      _
    %p237 = scmp.le.s32.totalorder 1, %s13
    %p238 = scmp.lt.s32.totalorder %s13, 5
    %p239 = pnand %p237, %p238
    %p240 = pneg %p239
    // Predicated region
    $region45: #{tpu_custom_call.1} parent=5 // pred_check
      _
    $region46: #{tpu_custom_call.1} parent=5 // pred_check_branch
      %242 = sbr.rel (%p239) target = $region48
    $region47: #{tpu_custom_call.1} parent=5 // pred_region
      %s243 = ssub.s32 %s13, 1
      %s244 = smul.u32 64, %s18
      %p245 = scmp.lt.s32.totalorder %s244, 255
      %s246 = scalar_select %p245, %s244, 255
      %s247 = smul.addr %s246, 8
      %s248 = scalar_lea.vmem %s0, %s247
      %p249 = pneg %p39
      %p250 = pneg %p36
      %p251 = pneg %p60
      %p252 = pneg %p57
      %p253 = pneg %p81
      %p254 = pneg %p78
      %p255 = pneg %p102
      %p256 = pneg %p99
      %p257 = pneg %p123
      %p258 = pneg %p120
      %p259 = pneg %p144
      %p260 = pneg %p141
      %p261 = pneg %p165
      %p262 = pneg %p162
      %p263 = pneg %p191
      %p264 = pneg %p188
      %s265 = smul.u32 64, %s18
      %p266 = scmp.lt.s32.totalorder %s265, 255
      %s267 = scalar_select %p266, %s265, 255
      %s268 = smul.addr %s267, 8
      %s269 = scalar_lea.vmem %s7, %s268
      %s270 = smul.u32 64, %s18
      %p271 = scmp.lt.s32.totalorder %s270, 255
      %s272 = scalar_select %p271, %s270, 255
      %s273 = smul.addr %s272, 8
      %s274 = scalar_lea.vmem %s0, %s273
      %s275 = smul.u32 64, %s18
      %s276 = smul.u32 64, %s18
      %p277 = scmp.lt.s32.totalorder %s276, 255
      %s278 = scalar_select %p277, %s276, 255
      %s279 = smul.addr %s278, 8
      %s280 = scalar_lea.vmem %s7, %s279
      %s281 = smul.u32 64, %s18
      %v282 = vld [vmem:[%s274] sm:$0xff]
      %v283 = vld [vmem:[%s274 + $0x8] sm:$0xff]
      %v284 = vld [vmem:[%s274 + $0x10] sm:$0xff]
      %v285 = vld [vmem:[%s274 + $0x18] sm:$0xff]
      %v286 = vld [vmem:[%s274 + $0x20] sm:$0xff]
      %v287 = vld [vmem:[%s274 + $0x28] sm:$0xff]
      %v288 = vld [vmem:[%s274 + $0x30] sm:$0xff]
      %v289 = vld [vmem:[%s274 + $0x38] sm:$0xff]
      %v290 = vld [vmem:[%s274 + $0x40] sm:$0xff]
      %v291 = vld [vmem:[%s274 + $0x48] sm:$0xff]
      %v292 = vld [vmem:[%s274 + $0x50] sm:$0xff]
      %v293 = vld [vmem:[%s274 + $0x58] sm:$0xff]
      %v294 = vld [vmem:[%s274 + $0x60] sm:$0xff]
      %v295 = vld [vmem:[%s274 + $0x68] sm:$0xff]
      %v296 = vld [vmem:[%s274 + $0x70] sm:$0xff]
      %v297 = vld [vmem:[%s274 + $0x78] sm:$0xff]
      %v298 = vld [vmem:[%s274 + $0x80] sm:$0xff]
      %v299 = vld [vmem:[%s274 + $0x88] sm:$0xff]
      %v300 = vld [vmem:[%s274 + $0x90] sm:$0xff]
      %v301 = vld [vmem:[%s274 + $0x98] sm:$0xff]
      %v302 = vld [vmem:[%s274 + $0xa0] sm:$0xff]
      %v303 = vld [vmem:[%s274 + $0xa8] sm:$0xff]
      %v304 = vld [vmem:[%s274 + $0xb0] sm:$0xff]
      %v305 = vld [vmem:[%s274 + $0xb8] sm:$0xff]
      %v306 = vld [vmem:[%s274 + $0xc0] sm:$0xff]
      %v307 = vld [vmem:[%s274 + $0xc8] sm:$0xff]
      %v308 = vld [vmem:[%s274 + $0xd0] sm:$0xff]
      %v309 = vld [vmem:[%s274 + $0xd8] sm:$0xff]
      %v310 = vld [vmem:[%s274 + $0xe0] sm:$0xff]
      %v311 = vld [vmem:[%s274 + $0xe8] sm:$0xff]
      %v312 = vld [vmem:[%s274 + $0xf0] sm:$0xff]
      %v313 = vld [vmem:[%s274 + $0xf8] sm:$0xff]
      %v314 = vld [vmem:[%s274 + $0x100] sm:$0xff]
      %v315 = vld [vmem:[%s274 + $0x108] sm:$0xff]
      %v316 = vld [vmem:[%s274 + $0x110] sm:$0xff]
      %v317 = vld [vmem:[%s274 + $0x118] sm:$0xff]
      %v318 = vld [vmem:[%s274 + $0x120] sm:$0xff]
      %v319 = vld [vmem:[%s274 + $0x128] sm:$0xff]
      %v320 = vld [vmem:[%s274 + $0x130] sm:$0xff]
      %v321 = vld [vmem:[%s274 + $0x138] sm:$0xff]
      %v322 = vld [vmem:[%s274 + $0x140] sm:$0xff]
      %v323 = vld [vmem:[%s274 + $0x148] sm:$0xff]
      %v324 = vld [vmem:[%s274 + $0x150] sm:$0xff]
      %v325 = vld [vmem:[%s274 + $0x158] sm:$0xff]
      %v326 = vld [vmem:[%s274 + $0x160] sm:$0xff]
      %v327 = vld [vmem:[%s274 + $0x168] sm:$0xff]
      %v328 = vld [vmem:[%s274 + $0x170] sm:$0xff]
      %v329 = vld [vmem:[%s274 + $0x178] sm:$0xff]
      %v330 = vld [vmem:[%s274 + $0x180] sm:$0xff]
      %v331 = vld [vmem:[%s274 + $0x188] sm:$0xff]
      %v332 = vld [vmem:[%s274 + $0x190] sm:$0xff]
      %v333 = vld [vmem:[%s274 + $0x198] sm:$0xff]
      %v334 = vld [vmem:[%s274 + $0x1a0] sm:$0xff]
      %v335 = vld [vmem:[%s274 + $0x1a8] sm:$0xff]
      %v336 = vld [vmem:[%s274 + $0x1b0] sm:$0xff]
      %v337 = vld [vmem:[%s274 + $0x1b8] sm:$0xff]
      %v338 = vld [vmem:[%s274 + $0x1c0] sm:$0xff]
      %v339 = vld [vmem:[%s274 + $0x1c8] sm:$0xff]
      %v340 = vld [vmem:[%s274 + $0x1d0] sm:$0xff]
      %v341 = vld [vmem:[%s274 + $0x1d8] sm:$0xff]
      %v342 = vld [vmem:[%s274 + $0x1e0] sm:$0xff]
      %v343 = vld [vmem:[%s274 + $0x1e8] sm:$0xff]
      %v344 = vld [vmem:[%s274 + $0x1f0] sm:$0xff]
      %v345 = vld [vmem:[%s274 + $0x1f8] sm:$0xff]
      %v346 = vld [vmem:[%s1] sm:$0xff]
      %v347 = vld [vmem:[%s1 + $0x8] sm:$0xff]
      %v348 = vld [vmem:[%s1 + $0x10] sm:$0xff]
      %v349 = vld [vmem:[%s1 + $0x18] sm:$0xff]
      %v350 = vld [vmem:[%s1 + $0x20] sm:$0xff]
      %v351 = vld [vmem:[%s1 + $0x28] sm:$0xff]
      %v352 = vld [vmem:[%s1 + $0x30] sm:$0x1]
      %v353 = vld [vmem:[%s2] sm:$0x1]
      %v355 = vlaneseq
      %v356 = vshrl.u32 %v355, 7
      %v357 = vsub.s32 0, %v356
      %v358 = vrot.slane %v353, %v357
      %vm360 = vcmask 400384
      %v362 = vsel %vm360, %v282, 0
      %v365 = vsel %vm360, %v283, 0
      %v368 = vsel %vm360, %v284, 0
      %v371 = vsel %vm360, %v285, 0
      %v374 = vsel %vm360, %v286, 0
      %v377 = vsel %vm360, %v287, 0
      %v380 = vsel %vm360, %v288, 0
      %v383 = vsel %vm360, %v289, 0
      %v386 = vsel %vm360, %v290, 0
      %v389 = vsel %vm360, %v291, 0
      %v392 = vsel %vm360, %v292, 0
      %v395 = vsel %vm360, %v293, 0
      %v398 = vsel %vm360, %v294, 0
      %v401 = vsel %vm360, %v295, 0
      %v404 = vsel %vm360, %v296, 0
      %v407 = vsel %vm360, %v297, 0
      %v410 = vsel %vm360, %v298, 0
      %v413 = vsel %vm360, %v299, 0
      %v416 = vsel %vm360, %v300, 0
      %v419 = vsel %vm360, %v301, 0
      %v422 = vsel %vm360, %v302, 0
      %v425 = vsel %vm360, %v303, 0
      %v428 = vsel %vm360, %v304, 0
      %v431 = vsel %vm360, %v305, 0
      %v434 = vsel %vm360, %v306, 0
      %v437 = vsel %vm360, %v307, 0
      %v440 = vsel %vm360, %v308, 0
      %v443 = vsel %vm360, %v309, 0
      %v446 = vsel %vm360, %v310, 0
      %v449 = vsel %vm360, %v311, 0
      %v452 = vsel %vm360, %v312, 0
      %v455 = vsel %vm360, %v313, 0
      %v458 = vsel %vm360, %v314, 0
      %v461 = vsel %vm360, %v315, 0
      %v464 = vsel %vm360, %v316, 0
      %v467 = vsel %vm360, %v317, 0
      %v470 = vsel %vm360, %v318, 0
      %v473 = vsel %vm360, %v319, 0
      %v476 = vsel %vm360, %v320, 0
      %v479 = vsel %vm360, %v321, 0
      %v482 = vsel %vm360, %v322, 0
      %v485 = vsel %vm360, %v323, 0
      %v488 = vsel %vm360, %v324, 0
      %v491 = vsel %vm360, %v325, 0
      %v494 = vsel %vm360, %v326, 0
      %v497 = vsel %vm360, %v327, 0
      %v500 = vsel %vm360, %v328, 0
      %v503 = vsel %vm360, %v329, 0
      %v506 = vsel %vm360, %v330, 0
      %v509 = vsel %vm360, %v331, 0
      %v512 = vsel %vm360, %v332, 0
      %v515 = vsel %vm360, %v333, 0
      %v518 = vsel %vm360, %v334, 0
      %v521 = vsel %vm360, %v335, 0
      %v524 = vsel %vm360, %v336, 0
      %v527 = vsel %vm360, %v337, 0
      %v530 = vsel %vm360, %v338, 0
      %v533 = vsel %vm360, %v339, 0
      %v536 = vsel %vm360, %v340, 0
      %v539 = vsel %vm360, %v341, 0
      %v542 = vsel %vm360, %v342, 0
      %v545 = vsel %vm360, %v343, 0
      %v548 = vsel %vm360, %v344, 0
      %v551 = vsel %vm360, %v345, 0
      %vm553 = vcmask 1040384
      %v555 = vsel %vm553, %v352, 0
      %557 = vmatprep.subr.mxu0 0.0
      %558 = vmatpush1.msra.mxu0 %v346
      %559 = vmatprep.subr.mxu0 0.0
      %560 = vmatpush1.msra.mxu0 %v347
      %561 = vmatprep.subr.mxu0 0.0
      %562 = vmatpush1.msra.mxu0 %v348
      %563 = vmatprep.subr.mxu0 0.0
      %564 = vmatpush1.msra.mxu0 %v349
      %565 = vmatprep.subr.mxu0 0.0
      %566 = vmatpush1.msra.mxu0 %v350
      %567 = vmatprep.subr.mxu0 0.0
      %568 = vmatpush1.msra.mxu0 %v351
      %569 = vmatprep.subr.mxu0 0.0
      %570 = vmatpush1.msra.mxu0 %v555
      %571 = vmatprep.subr.mxu0 0.0
      %572 = vmatpush1.msra.mxu0 0.0
      %573 = vmatprep.subr.mxu0 0.0
      %574 = vmatpush1.msra.mxu0 0.0
      %575 = vmatprep.subr.mxu0 0.0
      %576 = vmatpush1.msra.mxu0 0.0
      %577 = vmatprep.subr.mxu0 0.0
      %578 = vmatpush1.msra.mxu0 0.0
      %579 = vmatprep.subr.mxu0 0.0
      %580 = vmatpush1.msra.mxu0 0.0
      %581 = vmatprep.subr.mxu0 0.0
      %582 = vmatpush1.msra.mxu0 0.0
      %583 = vmatprep.subr.mxu0 0.0
      %584 = vmatpush1.msra.mxu0 0.0
      %585 = vmatprep.subr.mxu0 0.0
      %586 = vmatpush1.msra.mxu0 0.0
      %587 = vmatprep.subr.mxu0 0.0
      %588 = vmatpush1.msra.mxu0 0.0
      %589 = vmatprep.subr.mxu0 0.0
      %590 = vmatpush1.msra.mxu0 0.0
      %591 = vmatprep.subr.mxu0 0.0
      %592 = vmatpush1.msra.mxu0 0.0
      %593 = vmatprep.subr.mxu0 0.0
      %594 = vmatpush1.msra.mxu0 0.0
      %595 = vmatprep.subr.mxu0 0.0
      %596 = vmatpush1.msra.mxu0 0.0
      %597 = vmatprep.subr.mxu0 0.0
      %598 = vmatpush1.msra.mxu0 0.0
      %599 = vmatprep.subr.mxu0 0.0
      %600 = vmatpush1.msra.mxu0 0.0
      %601 = vmatprep.subr.mxu0 0.0
      %602 = vmatpush1.msra.mxu0 0.0
      %603 = vmatprep.subr.mxu0 0.0
      %604 = vmatpush1.msra.mxu0 0.0
      %605 = vmatprep.subr.mxu0 0.0
      %606 = vmatpush1.msra.mxu0 0.0
      %607 = vmatprep.subr.mxu0 0.0
      %608 = vmatpush1.msra.mxu0 0.0
      %609 = vmatprep.subr.mxu0 0.0
      %610 = vmatpush1.msra.mxu0 0.0
      %611 = vmatprep.subr.mxu0 0.0
      %612 = vmatpush1.msra.mxu0 0.0
      %613 = vmatprep.subr.mxu0 0.0
      %614 = vmatpush1.msra.mxu0 0.0
      %615 = vmatprep.subr.mxu0 0.0
      %616 = vmatpush1.msra.mxu0 0.0
      %617 = vmatprep.subr.mxu0 0.0
      %618 = vmatpush1.msra.mxu0 0.0
      %619 = vmatprep.subr.mxu0 0.0
      %620 = vmatpush1.msra.mxu0 0.0
      %621 = vmatprep.mubr.f32.mxu0 0.0
      %622 = vmatmul.mubr.f32.gmra.mrb[0].mxu0 %v362
      %v623 = vpop.f32.mrb[0].mxu0
      %v624 = vadd.f32 %v358, %v623
      %v625 = vpop.f32.mrb[0].mxu0
      %626 = vmatprep.mubr.f32.mxu0 0.0
      %627 = vmatmul.mubr.f32.gmra.mrb[0].mxu0 %v365
      %v628 = vpop.f32.mrb[0].mxu0
      %v629 = vadd.f32 %v358, %v628
      %v630 = vpop.f32.mrb[0].mxu0
      %631 = vmatprep.mubr.f32.mxu0 0.0
      %632 = vmatmul.mubr.f32.gmra.mrb[0].mxu0 %v368
      %v633 = vpop.f32.mrb[0].mxu0
      %v634 = vadd.f32 %v358, %v633
      %v635 = vpop.f32.mrb[0].mxu0
      %636 = vmatprep.mubr.f32.mxu0 0.0
      %637 = vmatmul.mubr.f32.gmra.mrb[0].mxu0 %v371
      %v638 = vpop.f32.mrb[0].mxu0
      %v639 = vadd.f32 %v358, %v638
      %v640 = vpop.f32.mrb[0].mxu0
      %641 = vmatprep.mubr.f32.mxu0 0.0
      %642 = vmatmul.mubr.f32.gmra.mrb[0].mxu0 %v374
      %v643 = vpop.f32.mrb[0].mxu0
      %v644 = vadd.f32 %v358, %v643
      %v645 = vpop.f32.mrb[0].mxu0
      %646 = vmatprep.mubr.f32.mxu0 0.0
      %647 = vmatmul.mubr.f32.gmra.mrb[0].mxu0 %v377
      %v648 = vpop.f32.mrb[0].mxu0
      %v649 = vadd.f32 %v358, %v648
      %v650 = vpop.f32.mrb[0].mxu0
      %651 = vmatprep.mubr.f32.mxu0 0.0
      %652 = vmatmul.mubr.f32.gmra.mrb[0].mxu0 %v380
      %v653 = vpop.f32.mrb[0].mxu0
      %v654 = vadd.f32 %v358, %v653
      %v655 = vpop.f32.mrb[0].mxu0
      %656 = vmatprep.mubr.f32.mxu0 0.0
      %657 = vmatmul.mubr.f32.gmra.mrb[0].mxu0 %v383
      %v658 = vpop.f32.mrb[0].mxu0
      %v659 = vadd.f32 %v358, %v658
      %v660 = vpop.f32.mrb[0].mxu0
      %661 = vmatprep.mubr.f32.mxu0 0.0
      %662 = vmatmul.mubr.f32.gmra.mrb[0].mxu0 %v386
      %v663 = vpop.f32.mrb[0].mxu0
      %v664 = vadd.f32 %v358, %v663
      %v665 = vpop.f32.mrb[0].mxu0
      %666 = vmatprep.mubr.f32.mxu0 0.0
      %667 = vmatmul.mubr.f32.gmra.mrb[0].mxu0 %v389
      %v668 = vpop.f32.mrb[0].mxu0
      %v669 = vadd.f32 %v358, %v668
      %v670 = vpop.f32.mrb[0].mxu0
      %671 = vmatprep.mubr.f32.mxu0 0.0
      %672 = vmatmul.mubr.f32.gmra.mrb[0].mxu0 %v392
      %v673 = vpop.f32.mrb[0].mxu0
      %v674 = vadd.f32 %v358, %v673
      %v675 = vpop.f32.mrb[0].mxu0
      %676 = vmatprep.mubr.f32.mxu0 0.0
      %677 = vmatmul.mubr.f32.gmra.mrb[0].mxu0 %v395
      %v678 = vpop.f32.mrb[0].mxu0
      %v679 = vadd.f32 %v358, %v678
      %v680 = vpop.f32.mrb[0].mxu0
      %681 = vmatprep.mubr.f32.mxu0 0.0
      %682 = vmatmul.mubr.f32.gmra.mrb[0].mxu0 %v398
      %v683 = vpop.f32.mrb[0].mxu0
      %v684 = vadd.f32 %v358, %v683
      %v685 = vpop.f32.mrb[0].mxu0
      %686 = vmatprep.mubr.f32.mxu0 0.0
      %687 = vmatmul.mubr.f32.gmra.mrb[0].mxu0 %v401
      %v688 = vpop.f32.mrb[0].mxu0
      %v689 = vadd.f32 %v358, %v688
      %v690 = vpop.f32.mrb[0].mxu0
      %691 = vmatprep.mubr.f32.mxu0 0.0
      %692 = vmatmul.mubr.f32.gmra.mrb[0].mxu0 %v404
      %v693 = vpop.f32.mrb[0].mxu0
      %v694 = vadd.f32 %v358, %v693
      %v695 = vpop.f32.mrb[0].mxu0
      %696 = vmatprep.mubr.f32.mxu0 0.0
      %697 = vmatmul.mubr.f32.gmra.mrb[0].mxu0 %v407
      %v698 = vpop.f32.mrb[0].mxu0
      %v699 = vadd.f32 %v358, %v698
      %v700 = vpop.f32.mrb[0].mxu0
      %701 = vmatprep.mubr.f32.mxu0 0.0
      %702 = vmatmul.mubr.f32.gmra.mrb[0].mxu0 %v410
      %v703 = vpop.f32.mrb[0].mxu0
      %v704 = vadd.f32 %v358, %v703
      %v705 = vpop.f32.mrb[0].mxu0
      %706 = vmatprep.mubr.f32.mxu0 0.0
      %707 = vmatmul.mubr.f32.gmra.mrb[0].mxu0 %v413
      %v708 = vpop.f32.mrb[0].mxu0
      %v709 = vadd.f32 %v358, %v708
      %v710 = vpop.f32.mrb[0].mxu0
      %711 = vmatprep.mubr.f32.mxu0 0.0
      %712 = vmatmul.mubr.f32.gmra.mrb[0].mxu0 %v416
      %v713 = vpop.f32.mrb[0].mxu0
      %v714 = vadd.f32 %v358, %v713
      %v715 = vpop.f32.mrb[0].mxu0
      %716 = vmatprep.mubr.f32.mxu0 0.0
      %717 = vmatmul.mubr.f32.gmra.mrb[0].mxu0 %v419
      %v718 = vpop.f32.mrb[0].mxu0
      %v719 = vadd.f32 %v358, %v718
      %v720 = vpop.f32.mrb[0].mxu0
      %721 = vmatprep.mubr.f32.mxu0 0.0
      %722 = vmatmul.mubr.f32.gmra.mrb[0].mxu0 %v422
      %v723 = vpop.f32.mrb[0].mxu0
      %v724 = vadd.f32 %v358, %v723
      %v725 = vpop.f32.mrb[0].mxu0
      %726 = vmatprep.mubr.f32.mxu0 0.0
      %727 = vmatmul.mubr.f32.gmra.mrb[0].mxu0 %v425
      %v728 = vpop.f32.mrb[0].mxu0
      %v729 = vadd.f32 %v358, %v728
      %v730 = vpop.f32.mrb[0].mxu0
      %731 = vmatprep.mubr.f32.mxu0 0.0
      %732 = vmatmul.mubr.f32.gmra.mrb[0].mxu0 %v428
      %v733 = vpop.f32.mrb[0].mxu0
      %v734 = vadd.f32 %v358, %v733
      %v735 = vpop.f32.mrb[0].mxu0
      %736 = vmatprep.mubr.f32.mxu0 0.0
      %737 = vmatmul.mubr.f32.gmra.mrb[0].mxu0 %v431
      %v738 = vpop.f32.mrb[0].mxu0
      %v739 = vadd.f32 %v358, %v738
      %v740 = vpop.f32.mrb[0].mxu0
      %741 = vmatprep.mubr.f32.mxu0 0.0
      %742 = vmatmul.mubr.f32.gmra.mrb[0].mxu0 %v434
      %v743 = vpop.f32.mrb[0].mxu0
      %v744 = vadd.f32 %v358, %v743
      %v745 = vpop.f32.mrb[0].mxu0
      %746 = vmatprep.mubr.f32.mxu0 0.0
      %747 = vmatmul.mubr.f32.gmra.mrb[0].mxu0 %v437
      %v748 = vpop.f32.mrb[0].mxu0
      %v749 = vadd.f32 %v358, %v748
      %v750 = vpop.f32.mrb[0].mxu0
      %751 = vmatprep.mubr.f32.mxu0 0.0
      %752 = vmatmul.mubr.f32.gmra.mrb[0].mxu0 %v440
      %v753 = vpop.f32.mrb[0].mxu0
      %v754 = vadd.f32 %v358, %v753
      %v755 = vpop.f32.mrb[0].mxu0
      %756 = vmatprep.mubr.f32.mxu0 0.0
      %757 = vmatmul.mubr.f32.gmra.mrb[0].mxu0 %v443
      %v758 = vpop.f32.mrb[0].mxu0
      %v759 = vadd.f32 %v358, %v758
      %v760 = vpop.f32.mrb[0].mxu0
      %761 = vmatprep.mubr.f32.mxu0 0.0
      %762 = vmatmul.mubr.f32.gmra.mrb[0].mxu0 %v446
      %v763 = vpop.f32.mrb[0].mxu0
      %v764 = vadd.f32 %v358, %v763
      %v765 = vpop.f32.mrb[0].mxu0
      %766 = vmatprep.mubr.f32.mxu0 0.0
      %767 = vmatmul.mubr.f32.gmra.mrb[0].mxu0 %v449
      %v768 = vpop.f32.mrb[0].mxu0
      %v769 = vadd.f32 %v358, %v768
      %v770 = vpop.f32.mrb[0].mxu0
      %771 = vmatprep.mubr.f32.mxu0 0.0
      %772 = vmatmul.mubr.f32.gmra.mrb[0].mxu0 %v452
      %v773 = vpop.f32.mrb[0].mxu0
      %v774 = vadd.f32 %v358, %v773
      %v775 = vpop.f32.mrb[0].mxu0
      %776 = vmatprep.mubr.f32.mxu0 0.0
      %777 = vmatmul.mubr.f32.gmra.mrb[0].mxu0 %v455
      %v778 = vpop.f32.mrb[0].mxu0
      %v779 = vadd.f32 %v358, %v778
      %v780 = vpop.f32.mrb[0].mxu0
      %781 = vmatprep.mubr.f32.mxu0 0.0
      %782 = vmatmul.mubr.f32.gmra.mrb[0].mxu0 %v458
      %v783 = vpop.f32.mrb[0].mxu0
      %v784 = vadd.f32 %v358, %v783
      %v785 = vpop.f32.mrb[0].mxu0
      %786 = vmatprep.mubr.f32.mxu0 0.0
      %787 = vmatmul.mubr.f32.gmra.mrb[0].mxu0 %v461
      %v788 = vpop.f32.mrb[0].mxu0
      %v789 = vadd.f32 %v358, %v788
      %v790 = vpop.f32.mrb[0].mxu0
      %791 = vmatprep.mubr.f32.mxu0 0.0
      %792 = vmatmul.mubr.f32.gmra.mrb[0].mxu0 %v464
      %v793 = vpop.f32.mrb[0].mxu0
      %v794 = vadd.f32 %v358, %v793
      %v795 = vpop.f32.mrb[0].mxu0
      %796 = vmatprep.mubr.f32.mxu0 0.0
      %797 = vmatmul.mubr.f32.gmra.mrb[0].mxu0 %v467
      %v798 = vpop.f32.mrb[0].mxu0
      %v799 = vadd.f32 %v358, %v798
      %v800 = vpop.f32.mrb[0].mxu0
      %801 = vmatprep.mubr.f32.mxu0 0.0
      %802 = vmatmul.mubr.f32.gmra.mrb[0].mxu0 %v470
      %v803 = vpop.f32.mrb[0].mxu0
      %v804 = vadd.f32 %v358, %v803
      %v805 = vpop.f32.mrb[0].mxu0
      %806 = vmatprep.mubr.f32.mxu0 0.0
      %807 = vmatmul.mubr.f32.gmra.mrb[0].mxu0 %v473
      %v808 = vpop.f32.mrb[0].mxu0
      %v809 = vadd.f32 %v358, %v808
      %v810 = vpop.f32.mrb[0].mxu0
      %811 = vmatprep.mubr.f32.mxu0 0.0
      %812 = vmatmul.mubr.f32.gmra.mrb[0].mxu0 %v476
      %v813 = vpop.f32.mrb[0].mxu0
      %v814 = vadd.f32 %v358, %v813
      %v815 = vpop.f32.mrb[0].mxu0
      %816 = vmatprep.mubr.f32.mxu0 0.0
      %817 = vmatmul.mubr.f32.gmra.mrb[0].mxu0 %v479
      %v818 = vpop.f32.mrb[0].mxu0
      %v819 = vadd.f32 %v358, %v818
      %v820 = vpop.f32.mrb[0].mxu0
      %821 = vmatprep.mubr.f32.mxu0 0.0
      %822 = vmatmul.mubr.f32.gmra.mrb[0].mxu0 %v482
      %v823 = vpop.f32.mrb[0].mxu0
      %v824 = vadd.f32 %v358, %v823
      %v825 = vpop.f32.mrb[0].mxu0
      %826 = vmatprep.mubr.f32.mxu0 0.0
      %827 = vmatmul.mubr.f32.gmra.mrb[0].mxu0 %v485
      %v828 = vpop.f32.mrb[0].mxu0
      %v829 = vadd.f32 %v358, %v828
      %v830 = vpop.f32.mrb[0].mxu0
      %831 = vmatprep.mubr.f32.mxu0 0.0
      %832 = vmatmul.mubr.f32.gmra.mrb[0].mxu0 %v488
      %v833 = vpop.f32.mrb[0].mxu0
      %v834 = vadd.f32 %v358, %v833
      %v835 = vpop.f32.mrb[0].mxu0
      %836 = vmatprep.mubr.f32.mxu0 0.0
      %837 = vmatmul.mubr.f32.gmra.mrb[0].mxu0 %v491
      %v838 = vpop.f32.mrb[0].mxu0
      %v839 = vadd.f32 %v358, %v838
      %v840 = vpop.f32.mrb[0].mxu0
      %841 = vmatprep.mubr.f32.mxu0 0.0
      %842 = vmatmul.mubr.f32.gmra.mrb[0].mxu0 %v494
      %v843 = vpop.f32.mrb[0].mxu0
      %v844 = vadd.f32 %v358, %v843
      %v845 = vpop.f32.mrb[0].mxu0
      %846 = vmatprep.mubr.f32.mxu0 0.0
      %847 = vmatmul.mubr.f32.gmra.mrb[0].mxu0 %v497
      %v848 = vpop.f32.mrb[0].mxu0
      %v849 = vadd.f32 %v358, %v848
      %v850 = vpop.f32.mrb[0].mxu0
      %851 = vmatprep.mubr.f32.mxu0 0.0
      %852 = vmatmul.mubr.f32.gmra.mrb[0].mxu0 %v500
      %v853 = vpop.f32.mrb[0].mxu0
      %v854 = vadd.f32 %v358, %v853
      %v855 = vpop.f32.mrb[0].mxu0
      %856 = vmatprep.mubr.f32.mxu0 0.0
      %857 = vmatmul.mubr.f32.gmra.mrb[0].mxu0 %v503
      %v858 = vpop.f32.mrb[0].mxu0
      %v859 = vadd.f32 %v358, %v858
      %v860 = vpop.f32.mrb[0].mxu0
      %861 = vmatprep.mubr.f32.mxu0 0.0
      %862 = vmatmul.mubr.f32.gmra.mrb[0].mxu0 %v506
      %v863 = vpop.f32.mrb[0].mxu0
      %v864 = vadd.f32 %v358, %v863
      %v865 = vpop.f32.mrb[0].mxu0
      %866 = vmatprep.mubr.f32.mxu0 0.0
      %867 = vmatmul.mubr.f32.gmra.mrb[0].mxu0 %v509
      %v868 = vpop.f32.mrb[0].mxu0
      %v869 = vadd.f32 %v358, %v868
      %v870 = vpop.f32.mrb[0].mxu0
      %871 = vmatprep.mubr.f32.mxu0 0.0
      %872 = vmatmul.mubr.f32.gmra.mrb[0].mxu0 %v512
      %v873 = vpop.f32.mrb[0].mxu0
      %v874 = vadd.f32 %v358, %v873
      %v875 = vpop.f32.mrb[0].mxu0
      %876 = vmatprep.mubr.f32.mxu0 0.0
      %877 = vmatmul.mubr.f32.gmra.mrb[0].mxu0 %v515
      %v878 = vpop.f32.mrb[0].mxu0
      %v879 = vadd.f32 %v358, %v878
      %v880 = vpop.f32.mrb[0].mxu0
      %881 = vmatprep.mubr.f32.mxu0 0.0
      %882 = vmatmul.mubr.f32.gmra.mrb[0].mxu0 %v518
      %v883 = vpop.f32.mrb[0].mxu0
      %v884 = vadd.f32 %v358, %v883
      %v885 = vpop.f32.mrb[0].mxu0
      %886 = vmatprep.mubr.f32.mxu0 0.0
      %887 = vmatmul.mubr.f32.gmra.mrb[0].mxu0 %v521
      %v888 = vpop.f32.mrb[0].mxu0
      %v889 = vadd.f32 %v358, %v888
      %v890 = vpop.f32.mrb[0].mxu0
      %891 = vmatprep.mubr.f32.mxu0 0.0
      %892 = vmatmul.mubr.f32.gmra.mrb[0].mxu0 %v524
      %v893 = vpop.f32.mrb[0].mxu0
      %v894 = vadd.f32 %v358, %v893
      %v895 = vpop.f32.mrb[0].mxu0
      %896 = vmatprep.mubr.f32.mxu0 0.0
      %897 = vmatmul.mubr.f32.gmra.mrb[0].mxu0 %v527
      %v898 = vpop.f32.mrb[0].mxu0
      %v899 = vadd.f32 %v358, %v898
      %v900 = vpop.f32.mrb[0].mxu0
      %901 = vmatprep.mubr.f32.mxu0 0.0
      %902 = vmatmul.mubr.f32.gmra.mrb[0].mxu0 %v530
      %v903 = vpop.f32.mrb[0].mxu0
      %v904 = vadd.f32 %v358, %v903
      %v905 = vpop.f32.mrb[0].mxu0
      %906 = vmatprep.mubr.f32.mxu0 0.0
      %907 = vmatmul.mubr.f32.gmra.mrb[0].mxu0 %v533
      %v908 = vpop.f32.mrb[0].mxu0
      %v909 = vadd.f32 %v358, %v908
      %v910 = vpop.f32.mrb[0].mxu0
      %911 = vmatprep.mubr.f32.mxu0 0.0
      %912 = vmatmul.mubr.f32.gmra.mrb[0].mxu0 %v536
      %v913 = vpop.f32.mrb[0].mxu0
      %v914 = vadd.f32 %v358, %v913
      %v915 = vpop.f32.mrb[0].mxu0
      %916 = vmatprep.mubr.f32.mxu0 0.0
      %917 = vmatmul.mubr.f32.gmra.mrb[0].mxu0 %v539
      %v918 = vpop.f32.mrb[0].mxu0
      %v919 = vadd.f32 %v358, %v918
      %v920 = vpop.f32.mrb[0].mxu0
      %921 = vmatprep.mubr.f32.mxu0 0.0
      %922 = vmatmul.mubr.f32.gmra.mrb[0].mxu0 %v542
      %v923 = vpop.f32.mrb[0].mxu0
      %v924 = vadd.f32 %v358, %v923
      %v925 = vpop.f32.mrb[0].mxu0
      %926 = vmatprep.mubr.f32.mxu0 0.0
      %927 = vmatmul.mubr.f32.gmra.mrb[0].mxu0 %v545
      %v928 = vpop.f32.mrb[0].mxu0
      %v929 = vadd.f32 %v358, %v928
      %v930 = vpop.f32.mrb[0].mxu0
      %931 = vmatprep.mubr.f32.mxu0 0.0
      %932 = vmatmul.mubr.f32.gmra.mrb[0].mxu0 %v548
      %v933 = vpop.f32.mrb[0].mxu0
      %v934 = vadd.f32 %v358, %v933
      %v935 = vpop.f32.mrb[0].mxu0
      %936 = vmatprep.mubr.f32.mxu0 0.0
      %937 = vmatmul.mubr.f32.gmra.mrb[0].mxu0 %v551
      %v938 = vpop.f32.mrb[0].mxu0
      %v939 = vadd.f32 %v358, %v938
      %v940 = vpop.f32.mrb[0].mxu0
      %941 = vdwg.mxu0
      %v942 = vmax.f32 %v624, 0.0
      %v943 = vmax.f32 %v629, 0.0
      %v944 = vmax.f32 %v634, 0.0
      %v945 = vmax.f32 %v639, 0.0
      %v946 = vmax.f32 %v644, 0.0
      %v947 = vmax.f32 %v649, 0.0
      %v948 = vmax.f32 %v654, 0.0
      %v949 = vmax.f32 %v659, 0.0
      %v950 = vmax.f32 %v664, 0.0
      %v951 = vmax.f32 %v669, 0.0
      %v952 = vmax.f32 %v674, 0.0
      %v953 = vmax.f32 %v679, 0.0
      %v954 = vmax.f32 %v684, 0.0
      %v955 = vmax.f32 %v689, 0.0
      %v956 = vmax.f32 %v694, 0.0
      %v957 = vmax.f32 %v699, 0.0
      %v958 = vmax.f32 %v704, 0.0
      %v959 = vmax.f32 %v709, 0.0
      %v960 = vmax.f32 %v714, 0.0
      %v961 = vmax.f32 %v719, 0.0
      %v962 = vmax.f32 %v724, 0.0
      %v963 = vmax.f32 %v729, 0.0
      %v964 = vmax.f32 %v734, 0.0
      %v965 = vmax.f32 %v739, 0.0
      %v966 = vmax.f32 %v744, 0.0
      %v967 = vmax.f32 %v749, 0.0
      %v968 = vmax.f32 %v754, 0.0
      %v969 = vmax.f32 %v759, 0.0
      %v970 = vmax.f32 %v764, 0.0
      %v971 = vmax.f32 %v769, 0.0
      %v972 = vmax.f32 %v774, 0.0
      %v973 = vmax.f32 %v779, 0.0
      %v974 = vmax.f32 %v784, 0.0
      %v975 = vmax.f32 %v789, 0.0
      %v976 = vmax.f32 %v794, 0.0
      %v977 = vmax.f32 %v799, 0.0
      %v978 = vmax.f32 %v804, 0.0
      %v979 = vmax.f32 %v809, 0.0
      %v980 = vmax.f32 %v814, 0.0
      %v981 = vmax.f32 %v819, 0.0
      %v982 = vmax.f32 %v824, 0.0
      %v983 = vmax.f32 %v829, 0.0
      %v984 = vmax.f32 %v834, 0.0
      %v985 = vmax.f32 %v839, 0.0
      %v986 = vmax.f32 %v844, 0.0
      %v987 = vmax.f32 %v849, 0.0
      %v988 = vmax.f32 %v854, 0.0
      %v989 = vmax.f32 %v859, 0.0
      %v990 = vmax.f32 %v864, 0.0
      %v991 = vmax.f32 %v869, 0.0
      %v992 = vmax.f32 %v874, 0.0
      %v993 = vmax.f32 %v879, 0.0
      %v994 = vmax.f32 %v884, 0.0
      %v995 = vmax.f32 %v889, 0.0
      %v996 = vmax.f32 %v894, 0.0
      %v997 = vmax.f32 %v899, 0.0
      %v998 = vmax.f32 %v904, 0.0
      %v999 = vmax.f32 %v909, 0.0
      %v1000 = vmax.f32 %v914, 0.0
      %v1001 = vmax.f32 %v919, 0.0
      %v1002 = vmax.f32 %v924, 0.0
      %v1003 = vmax.f32 %v929, 0.0
      %v1004 = vmax.f32 %v934, 0.0
      %v1005 = vmax.f32 %v939, 0.0
      %v1006 = vld [vmem:[%s3] sm:$0xff]
      %v1007 = vld [vmem:[%s3 + $0x8] sm:$0xff]
      %v1008 = vld [vmem:[%s3 + $0x10] sm:$0xff]
      %v1009 = vld [vmem:[%s3 + $0x18] sm:$0xff]
      %v1010 = vld [vmem:[%s3 + $0x20] sm:$0xff]
      %v1011 = vld [vmem:[%s3 + $0x28] sm:$0xff]
      %v1012 = vld [vmem:[%s3 + $0x30] sm:$0xff]
      %v1013 = vld [vmem:[%s3 + $0x38] sm:$0xff]
      %v1014 = vld [vmem:[%s4] sm:$0x1]
      %v1016 = vlaneseq
      %v1017 = vshrl.u32 %v1016, 7
      %v1018 = vsub.s32 0, %v1017
      %v1019 = vrot.slane %v1014, %v1018
      %vm1021 = vcmask 523264
      %v1023 = vsel %vm1021, %v942, 0
      %v1026 = vsel %vm1021, %v943, 0
      %v1029 = vsel %vm1021, %v944, 0
      %v1032 = vsel %vm1021, %v945, 0
      %v1035 = vsel %vm1021, %v946, 0
      %v1038 = vsel %vm1021, %v947, 0
      %v1041 = vsel %vm1021, %v948, 0
      %v1044 = vsel %vm1021, %v949, 0
      %v1047 = vsel %vm1021, %v950, 0
      %v1050 = vsel %vm1021, %v951, 0
      %v1053 = vsel %vm1021, %v952, 0
      %v1056 = vsel %vm1021, %v953, 0
      %v1059 = vsel %vm1021, %v954, 0
      %v1062 = vsel %vm1021, %v955, 0
      %v1065 = vsel %vm1021, %v956, 0
      %v1068 = vsel %vm1021, %v957, 0
      %v1071 = vsel %vm1021, %v958, 0
      %v1074 = vsel %vm1021, %v959, 0
      %v1077 = vsel %vm1021, %v960, 0
      %v1080 = vsel %vm1021, %v961, 0
      %v1083 = vsel %vm1021, %v962, 0
      %v1086 = vsel %vm1021, %v963, 0
      %v1089 = vsel %vm1021, %v964, 0
      %v1092 = vsel %vm1021, %v965, 0
      %v1095 = vsel %vm1021, %v966, 0
      %v1098 = vsel %vm1021, %v967, 0
      %v1101 = vsel %vm1021, %v968, 0
      %v1104 = vsel %vm1021, %v969, 0
      %v1107 = vsel %vm1021, %v970, 0
      %v1110 = vsel %vm1021, %v971, 0
      %v1113 = vsel %vm1021, %v972, 0
      %v1116 = vsel %vm1021, %v973, 0
      %v1119 = vsel %vm1021, %v974, 0
      %v1122 = vsel %vm1021, %v975, 0
      %v1125 = vsel %vm1021, %v976, 0
      %v1128 = vsel %vm1021, %v977, 0
      %v1131 = vsel %vm1021, %v978, 0
      %v1134 = vsel %vm1021, %v979, 0
      %v1137 = vsel %vm1021, %v980, 0
      %v1140 = vsel %vm1021, %v981, 0
      %v1143 = vsel %vm1021, %v982, 0
      %v1146 = vsel %vm1021, %v983, 0
      %v1149 = vsel %vm1021, %v984, 0
      %v1152 = vsel %vm1021, %v985, 0
      %v1155 = vsel %vm1021, %v986, 0
      %v1158 = vsel %vm1021, %v987, 0
      %v1161 = vsel %vm1021, %v988, 0
      %v1164 = vsel %vm1021, %v989, 0
      %v1167 = vsel %vm1021, %v990, 0
      %v1170 = vsel %vm1021, %v991, 0
      %v1173 = vsel %vm1021, %v992, 0
      %v1176 = vsel %vm1021, %v993, 0
      %v1179 = vsel %vm1021, %v994, 0
      %v1182 = vsel %vm1021, %v995, 0
      %v1185 = vsel %vm1021, %v996, 0
      %v1188 = vsel %vm1021, %v997, 0
      %v1191 = vsel %vm1021, %v998, 0
      %v1194 = vsel %vm1021, %v999, 0
      %v1197 = vsel %vm1021, %v1000, 0
      %v1200 = vsel %vm1021, %v1001, 0
      %v1203 = vsel %vm1021, %v1002, 0
      %v1206 = vsel %vm1021, %v1003, 0
      %v1209 = vsel %vm1021, %v1004, 0
      %v1212 = vsel %vm1021, %v1005, 0
      %1214 = vmatprep.subr.mxu0 0.0
      %1215 = vmatpush1.msra.mxu0 %v1006
      %1216 = vmatprep.subr.mxu0 0.0
      %1217 = vmatpush1.msra.mxu0 %v1007
      %1218 = vmatprep.subr.mxu0 0.0
      %1219 = vmatpush1.msra.mxu0 %v1008
      %1220 = vmatprep.subr.mxu0 0.0
      %1221 = vmatpush1.msra.mxu0 %v1009
      %1222 = vmatprep.subr.mxu0 0.0
      %1223 = vmatpush1.msra.mxu0 %v1010
      %1224 = vmatprep.subr.mxu0 0.0
      %1225 = vmatpush1.msra.mxu0 %v1011
      %1226 = vmatprep.subr.mxu0 0.0
      %1227 = vmatpush1.msra.mxu0 %v1012
      %1228 = vmatprep.subr.mxu0 0.0
      %1229 = vmatpush1.msra.mxu0 %v1013
      %1230 = vmatprep.subr.mxu0 0.0
      %1231 = vmatpush1.msra.mxu0 0.0
      %1232 = vmatprep.subr.mxu0 0.0
      %1233 = vmatpush1.msra.mxu0 0.0
      %1234 = vmatprep.subr.mxu0 0.0
      %1235 = vmatpush1.msra.mxu0 0.0
      %1236 = vmatprep.subr.mxu0 0.0
      %1237 = vmatpush1.msra.mxu0 0.0
      %1238 = vmatprep.subr.mxu0 0.0
      %1239 = vmatpush1.msra.mxu0 0.0
      %1240 = vmatprep.subr.mxu0 0.0
      %1241 = vmatpush1.msra.mxu0 0.0
      %1242 = vmatprep.subr.mxu0 0.0
      %1243 = vmatpush1.msra.mxu0 0.0
      %1244 = vmatprep.subr.mxu0 0.0
      %1245 = vmatpush1.msra.mxu0 0.0
      %1246 = vmatprep.subr.mxu0 0.0
      %1247 = vmatpush1.msra.mxu0 0.0
      %1248 = vmatprep.subr.mxu0 0.0
      %1249 = vmatpush1.msra.mxu0 0.0
      %1250 = vmatprep.subr.mxu0 0.0
      %1251 = vmatpush1.msra.mxu0 0.0
      %1252 = vmatprep.subr.mxu0 0.0
      %1253 = vmatpush1.msra.mxu0 0.0
      %1254 = vmatprep.subr.mxu0 0.0
      %1255 = vmatpush1.msra.mxu0 0.0
      %1256 = vmatprep.subr.mxu0 0.0
      %1257 = vmatpush1.msra.mxu0 0.0
      %1258 = vmatprep.subr.mxu0 0.0
      %1259 = vmatpush1.msra.mxu0 0.0
      %1260 = vmatprep.subr.mxu0 0.0
      %1261 = vmatpush1.msra.mxu0 0.0
      %1262 = vmatprep.subr.mxu0 0.0
      %1263 = vmatpush1.msra.mxu0 0.0
      %1264 = vmatprep.subr.mxu0 0.0
      %1265 = vmatpush1.msra.mxu0 0.0
      %1266 = vmatprep.subr.mxu0 0.0
      %1267 = vmatpush1.msra.mxu0 0.0
      %1268 = vmatprep.subr.mxu0 0.0
      %1269 = vmatpush1.msra.mxu0 0.0
      %1270 = vmatprep.subr.mxu0 0.0
      %1271 = vmatpush1.msra.mxu0 0.0
      %1272 = vmatprep.subr.mxu0 0.0
      %1273 = vmatpush1.msra.mxu0 0.0
      %1274 = vmatprep.subr.mxu0 0.0
      %1275 = vmatpush1.msra.mxu0 0.0
      %1276 = vmatprep.subr.mxu0 0.0
      %1277 = vmatpush1.msra.mxu0 0.0
      %1278 = vmatprep.mubr.f32.mxu0 0.0
      %1279 = vmatmul.mubr.f32.gmra.mrb[0].mxu0 %v1023
      %v1280 = vpop.f32.mrb[0].mxu0
      %v1281 = vadd.f32 %v1019, %v1280
      %v1282 = vpop.f32.mrb[0].mxu0
      %1283 = vmatprep.mubr.f32.mxu0 0.0
      %1284 = vmatmul.mubr.f32.gmra.mrb[0].mxu0 %v1026
      %v1285 = vpop.f32.mrb[0].mxu0
      %v1286 = vadd.f32 %v1019, %v1285
      %v1287 = vpop.f32.mrb[0].mxu0
      %1288 = vmatprep.mubr.f32.mxu0 0.0
      %1289 = vmatmul.mubr.f32.gmra.mrb[0].mxu0 %v1029
      %v1290 = vpop.f32.mrb[0].mxu0
      %v1291 = vadd.f32 %v1019, %v1290
      %v1292 = vpop.f32.mrb[0].mxu0
      %1293 = vmatprep.mubr.f32.mxu0 0.0
      %1294 = vmatmul.mubr.f32.gmra.mrb[0].mxu0 %v1032
      %v1295 = vpop.f32.mrb[0].mxu0
      %v1296 = vadd.f32 %v1019, %v1295
      %v1297 = vpop.f32.mrb[0].mxu0
      %1298 = vmatprep.mubr.f32.mxu0 0.0
      %1299 = vmatmul.mubr.f32.gmra.mrb[0].mxu0 %v1035
      %v1300 = vpop.f32.mrb[0].mxu0
      %v1301 = vadd.f32 %v1019, %v1300
      %v1302 = vpop.f32.mrb[0].mxu0
      %1303 = vmatprep.mubr.f32.mxu0 0.0
      %1304 = vmatmul.mubr.f32.gmra.mrb[0].mxu0 %v1038
      %v1305 = vpop.f32.mrb[0].mxu0
      %v1306 = vadd.f32 %v1019, %v1305
      %v1307 = vpop.f32.mrb[0].mxu0
      %1308 = vmatprep.mubr.f32.mxu0 0.0
      %1309 = vmatmul.mubr.f32.gmra.mrb[0].mxu0 %v1041
      %v1310 = vpop.f32.mrb[0].mxu0
      %v1311 = vadd.f32 %v1019, %v1310
      %v1312 = vpop.f32.mrb[0].mxu0
      %1313 = vmatprep.mubr.f32.mxu0 0.0
      %1314 = vmatmul.mubr.f32.gmra.mrb[0].mxu0 %v1044
      %v1315 = vpop.f32.mrb[0].mxu0
      %v1316 = vadd.f32 %v1019, %v1315
      %v1317 = vpop.f32.mrb[0].mxu0
      %1318 = vmatprep.mubr.f32.mxu0 0.0
      %1319 = vmatmul.mubr.f32.gmra.mrb[0].mxu0 %v1047
      %v1320 = vpop.f32.mrb[0].mxu0
      %v1321 = vadd.f32 %v1019, %v1320
      %v1322 = vpop.f32.mrb[0].mxu0
      %1323 = vmatprep.mubr.f32.mxu0 0.0
      %1324 = vmatmul.mubr.f32.gmra.mrb[0].mxu0 %v1050
      %v1325 = vpop.f32.mrb[0].mxu0
      %v1326 = vadd.f32 %v1019, %v1325
      %v1327 = vpop.f32.mrb[0].mxu0
      %1328 = vmatprep.mubr.f32.mxu0 0.0
      %1329 = vmatmul.mubr.f32.gmra.mrb[0].mxu0 %v1053
      %v1330 = vpop.f32.mrb[0].mxu0
      %v1331 = vadd.f32 %v1019, %v1330
      %v1332 = vpop.f32.mrb[0].mxu0
      %1333 = vmatprep.mubr.f32.mxu0 0.0
      %1334 = vmatmul.mubr.f32.gmra.mrb[0].mxu0 %v1056
      %v1335 = vpop.f32.mrb[0].mxu0
      %v1336 = vadd.f32 %v1019, %v1335
      %v1337 = vpop.f32.mrb[0].mxu0
      %1338 = vmatprep.mubr.f32.mxu0 0.0
      %1339 = vmatmul.mubr.f32.gmra.mrb[0].mxu0 %v1059
      %v1340 = vpop.f32.mrb[0].mxu0
      %v1341 = vadd.f32 %v1019, %v1340
      %v1342 = vpop.f32.mrb[0].mxu0
      %1343 = vmatprep.mubr.f32.mxu0 0.0
      %1344 = vmatmul.mubr.f32.gmra.mrb[0].mxu0 %v1062
      %v1345 = vpop.f32.mrb[0].mxu0
      %v1346 = vadd.f32 %v1019, %v1345
      %v1347 = vpop.f32.mrb[0].mxu0
      %1348 = vmatprep.mubr.f32.mxu0 0.0
      %1349 = vmatmul.mubr.f32.gmra.mrb[0].mxu0 %v1065
      %v1350 = vpop.f32.mrb[0].mxu0
      %v1351 = vadd.f32 %v1019, %v1350
      %v1352 = vpop.f32.mrb[0].mxu0
      %1353 = vmatprep.mubr.f32.mxu0 0.0
      %1354 = vmatmul.mubr.f32.gmra.mrb[0].mxu0 %v1068
      %v1355 = vpop.f32.mrb[0].mxu0
      %v1356 = vadd.f32 %v1019, %v1355
      %v1357 = vpop.f32.mrb[0].mxu0
      %1358 = vmatprep.mubr.f32.mxu0 0.0
      %1359 = vmatmul.mubr.f32.gmra.mrb[0].mxu0 %v1071
      %v1360 = vpop.f32.mrb[0].mxu0
      %v1361 = vadd.f32 %v1019, %v1360
      %v1362 = vpop.f32.mrb[0].mxu0
      %1363 = vmatprep.mubr.f32.mxu0 0.0
      %1364 = vmatmul.mubr.f32.gmra.mrb[0].mxu0 %v1074
      %v1365 = vpop.f32.mrb[0].mxu0
      %v1366 = vadd.f32 %v1019, %v1365
      %v1367 = vpop.f32.mrb[0].mxu0
      %1368 = vmatprep.mubr.f32.mxu0 0.0
      %1369 = vmatmul.mubr.f32.gmra.mrb[0].mxu0 %v1077
      %v1370 = vpop.f32.mrb[0].mxu0
      %v1371 = vadd.f32 %v1019, %v1370
      %v1372 = vpop.f32.mrb[0].mxu0
      %1373 = vmatprep.mubr.f32.mxu0 0.0
      %1374 = vmatmul.mubr.f32.gmra.mrb[0].mxu0 %v1080
      %v1375 = vpop.f32.mrb[0].mxu0
      %v1376 = vadd.f32 %v1019, %v1375
      %v1377 = vpop.f32.mrb[0].mxu0
      %1378 = vmatprep.mubr.f32.mxu0 0.0
      %1379 = vmatmul.mubr.f32.gmra.mrb[0].mxu0 %v1083
      %v1380 = vpop.f32.mrb[0].mxu0
      %v1381 = vadd.f32 %v1019, %v1380
      %v1382 = vpop.f32.mrb[0].mxu0
      %1383 = vmatprep.mubr.f32.mxu0 0.0
      %1384 = vmatmul.mubr.f32.gmra.mrb[0].mxu0 %v1086
      %v1385 = vpop.f32.mrb[0].mxu0
      %v1386 = vadd.f32 %v1019, %v1385
      %v1387 = vpop.f32.mrb[0].mxu0
      %1388 = vmatprep.mubr.f32.mxu0 0.0
      %1389 = vmatmul.mubr.f32.gmra.mrb[0].mxu0 %v1089
      %v1390 = vpop.f32.mrb[0].mxu0
      %v1391 = vadd.f32 %v1019, %v1390
      %v1392 = vpop.f32.mrb[0].mxu0
      %1393 = vmatprep.mubr.f32.mxu0 0.0
      %1394 = vmatmul.mubr.f32.gmra.mrb[0].mxu0 %v1092
      %v1395 = vpop.f32.mrb[0].mxu0
      %v1396 = vadd.f32 %v1019, %v1395
      %v1397 = vpop.f32.mrb[0].mxu0
      %1398 = vmatprep.mubr.f32.mxu0 0.0
      %1399 = vmatmul.mubr.f32.gmra.mrb[0].mxu0 %v1095
      %v1400 = vpop.f32.mrb[0].mxu0
      %v1401 = vadd.f32 %v1019, %v1400
      %v1402 = vpop.f32.mrb[0].mxu0
      %1403 = vmatprep.mubr.f32.mxu0 0.0
      %1404 = vmatmul.mubr.f32.gmra.mrb[0].mxu0 %v1098
      %v1405 = vpop.f32.mrb[0].mxu0
      %v1406 = vadd.f32 %v1019, %v1405
      %v1407 = vpop.f32.mrb[0].mxu0
      %1408 = vmatprep.mubr.f32.mxu0 0.0
      %1409 = vmatmul.mubr.f32.gmra.mrb[0].mxu0 %v1101
      %v1410 = vpop.f32.mrb[0].mxu0
      %v1411 = vadd.f32 %v1019, %v1410
      %v1412 = vpop.f32.mrb[0].mxu0
      %1413 = vmatprep.mubr.f32.mxu0 0.0
      %1414 = vmatmul.mubr.f32.gmra.mrb[0].mxu0 %v1104
      %v1415 = vpop.f32.mrb[0].mxu0
      %v1416 = vadd.f32 %v1019, %v1415
      %v1417 = vpop.f32.mrb[0].mxu0
      %1418 = vmatprep.mubr.f32.mxu0 0.0
      %1419 = vmatmul.mubr.f32.gmra.mrb[0].mxu0 %v1107
      %v1420 = vpop.f32.mrb[0].mxu0
      %v1421 = vadd.f32 %v1019, %v1420
      %v1422 = vpop.f32.mrb[0].mxu0
      %1423 = vmatprep.mubr.f32.mxu0 0.0
      %1424 = vmatmul.mubr.f32.gmra.mrb[0].mxu0 %v1110
      %v1425 = vpop.f32.mrb[0].mxu0
      %v1426 = vadd.f32 %v1019, %v1425
      %v1427 = vpop.f32.mrb[0].mxu0
      %1428 = vmatprep.mubr.f32.mxu0 0.0
      %1429 = vmatmul.mubr.f32.gmra.mrb[0].mxu0 %v1113
      %v1430 = vpop.f32.mrb[0].mxu0
      %v1431 = vadd.f32 %v1019, %v1430
      %v1432 = vpop.f32.mrb[0].mxu0
      %1433 = vmatprep.mubr.f32.mxu0 0.0
      %1434 = vmatmul.mubr.f32.gmra.mrb[0].mxu0 %v1116
      %v1435 = vpop.f32.mrb[0].mxu0
      %v1436 = vadd.f32 %v1019, %v1435
      %v1437 = vpop.f32.mrb[0].mxu0
      %1438 = vmatprep.mubr.f32.mxu0 0.0
      %1439 = vmatmul.mubr.f32.gmra.mrb[0].mxu0 %v1119
      %v1440 = vpop.f32.mrb[0].mxu0
      %v1441 = vadd.f32 %v1019, %v1440
      %v1442 = vpop.f32.mrb[0].mxu0
      %1443 = vmatprep.mubr.f32.mxu0 0.0
      %1444 = vmatmul.mubr.f32.gmra.mrb[0].mxu0 %v1122
      %v1445 = vpop.f32.mrb[0].mxu0
      %v1446 = vadd.f32 %v1019, %v1445
      %v1447 = vpop.f32.mrb[0].mxu0
      %1448 = vmatprep.mubr.f32.mxu0 0.0
      %1449 = vmatmul.mubr.f32.gmra.mrb[0].mxu0 %v1125
      %v1450 = vpop.f32.mrb[0].mxu0
      %v1451 = vadd.f32 %v1019, %v1450
      %v1452 = vpop.f32.mrb[0].mxu0
      %1453 = vmatprep.mubr.f32.mxu0 0.0
      %1454 = vmatmul.mubr.f32.gmra.mrb[0].mxu0 %v1128
      %v1455 = vpop.f32.mrb[0].mxu0
      %v1456 = vadd.f32 %v1019, %v1455
      %v1457 = vpop.f32.mrb[0].mxu0
      %1458 = vmatprep.mubr.f32.mxu0 0.0
      %1459 = vmatmul.mubr.f32.gmra.mrb[0].mxu0 %v1131
      %v1460 = vpop.f32.mrb[0].mxu0
      %v1461 = vadd.f32 %v1019, %v1460
      %v1462 = vpop.f32.mrb[0].mxu0
      %1463 = vmatprep.mubr.f32.mxu0 0.0
      %1464 = vmatmul.mubr.f32.gmra.mrb[0].mxu0 %v1134
      %v1465 = vpop.f32.mrb[0].mxu0
      %v1466 = vadd.f32 %v1019, %v1465
      %v1467 = vpop.f32.mrb[0].mxu0
      %1468 = vmatprep.mubr.f32.mxu0 0.0
      %1469 = vmatmul.mubr.f32.gmra.mrb[0].mxu0 %v1137
      %v1470 = vpop.f32.mrb[0].mxu0
      %v1471 = vadd.f32 %v1019, %v1470
      %v1472 = vpop.f32.mrb[0].mxu0
      %1473 = vmatprep.mubr.f32.mxu0 0.0
      %1474 = vmatmul.mubr.f32.gmra.mrb[0].mxu0 %v1140
      %v1475 = vpop.f32.mrb[0].mxu0
      %v1476 = vadd.f32 %v1019, %v1475
      %v1477 = vpop.f32.mrb[0].mxu0
      %1478 = vmatprep.mubr.f32.mxu0 0.0
      %1479 = vmatmul.mubr.f32.gmra.mrb[0].mxu0 %v1143
      %v1480 = vpop.f32.mrb[0].mxu0
      %v1481 = vadd.f32 %v1019, %v1480
      %v1482 = vpop.f32.mrb[0].mxu0
      %1483 = vmatprep.mubr.f32.mxu0 0.0
      %1484 = vmatmul.mubr.f32.gmra.mrb[0].mxu0 %v1146
      %v1485 = vpop.f32.mrb[0].mxu0
      %v1486 = vadd.f32 %v1019, %v1485
      %v1487 = vpop.f32.mrb[0].mxu0
      %1488 = vmatprep.mubr.f32.mxu0 0.0
      %1489 = vmatmul.mubr.f32.gmra.mrb[0].mxu0 %v1149
      %v1490 = vpop.f32.mrb[0].mxu0
      %v1491 = vadd.f32 %v1019, %v1490
      %v1492 = vpop.f32.mrb[0].mxu0
      %1493 = vmatprep.mubr.f32.mxu0 0.0
      %1494 = vmatmul.mubr.f32.gmra.mrb[0].mxu0 %v1152
      %v1495 = vpop.f32.mrb[0].mxu0
      %v1496 = vadd.f32 %v1019, %v1495
      %v1497 = vpop.f32.mrb[0].mxu0
      %1498 = vmatprep.mubr.f32.mxu0 0.0
      %1499 = vmatmul.mubr.f32.gmra.mrb[0].mxu0 %v1155
      %v1500 = vpop.f32.mrb[0].mxu0
      %v1501 = vadd.f32 %v1019, %v1500
      %v1502 = vpop.f32.mrb[0].mxu0
      %1503 = vmatprep.mubr.f32.mxu0 0.0
      %1504 = vmatmul.mubr.f32.gmra.mrb[0].mxu0 %v1158
      %v1505 = vpop.f32.mrb[0].mxu0
      %v1506 = vadd.f32 %v1019, %v1505
      %v1507 = vpop.f32.mrb[0].mxu0
      %1508 = vmatprep.mubr.f32.mxu0 0.0
      %1509 = vmatmul.mubr.f32.gmra.mrb[0].mxu0 %v1161
      %v1510 = vpop.f32.mrb[0].mxu0
      %v1511 = vadd.f32 %v1019, %v1510
      %v1512 = vpop.f32.mrb[0].mxu0
      %1513 = vmatprep.mubr.f32.mxu0 0.0
      %1514 = vmatmul.mubr.f32.gmra.mrb[0].mxu0 %v1164
      %v1515 = vpop.f32.mrb[0].mxu0
      %v1516 = vadd.f32 %v1019, %v1515
      %v1517 = vpop.f32.mrb[0].mxu0
      %1518 = vmatprep.mubr.f32.mxu0 0.0
      %1519 = vmatmul.mubr.f32.gmra.mrb[0].mxu0 %v1167
      %v1520 = vpop.f32.mrb[0].mxu0
      %v1521 = vadd.f32 %v1019, %v1520
      %v1522 = vpop.f32.mrb[0].mxu0
      %1523 = vmatprep.mubr.f32.mxu0 0.0
      %1524 = vmatmul.mubr.f32.gmra.mrb[0].mxu0 %v1170
      %v1525 = vpop.f32.mrb[0].mxu0
      %v1526 = vadd.f32 %v1019, %v1525
      %v1527 = vpop.f32.mrb[0].mxu0
      %1528 = vmatprep.mubr.f32.mxu0 0.0
      %1529 = vmatmul.mubr.f32.gmra.mrb[0].mxu0 %v1173
      %v1530 = vpop.f32.mrb[0].mxu0
      %v1531 = vadd.f32 %v1019, %v1530
      %v1532 = vpop.f32.mrb[0].mxu0
      %1533 = vmatprep.mubr.f32.mxu0 0.0
      %1534 = vmatmul.mubr.f32.gmra.mrb[0].mxu0 %v1176
      %v1535 = vpop.f32.mrb[0].mxu0
      %v1536 = vadd.f32 %v1019, %v1535
      %v1537 = vpop.f32.mrb[0].mxu0
      %1538 = vmatprep.mubr.f32.mxu0 0.0
      %1539 = vmatmul.mubr.f32.gmra.mrb[0].mxu0 %v1179
      %v1540 = vpop.f32.mrb[0].mxu0
      %v1541 = vadd.f32 %v1019, %v1540
      %v1542 = vpop.f32.mrb[0].mxu0
      %1543 = vmatprep.mubr.f32.mxu0 0.0
      %1544 = vmatmul.mubr.f32.gmra.mrb[0].mxu0 %v1182
      %v1545 = vpop.f32.mrb[0].mxu0
      %v1546 = vadd.f32 %v1019, %v1545
      %v1547 = vpop.f32.mrb[0].mxu0
      %1548 = vmatprep.mubr.f32.mxu0 0.0
      %1549 = vmatmul.mubr.f32.gmra.mrb[0].mxu0 %v1185
      %v1550 = vpop.f32.mrb[0].mxu0
      %v1551 = vadd.f32 %v1019, %v1550
      %v1552 = vpop.f32.mrb[0].mxu0
      %1553 = vmatprep.mubr.f32.mxu0 0.0
      %1554 = vmatmul.mubr.f32.gmra.mrb[0].mxu0 %v1188
      %v1555 = vpop.f32.mrb[0].mxu0
      %v1556 = vadd.f32 %v1019, %v1555
      %v1557 = vpop.f32.mrb[0].mxu0
      %1558 = vmatprep.mubr.f32.mxu0 0.0
      %1559 = vmatmul.mubr.f32.gmra.mrb[0].mxu0 %v1191
      %v1560 = vpop.f32.mrb[0].mxu0
      %v1561 = vadd.f32 %v1019, %v1560
      %v1562 = vpop.f32.mrb[0].mxu0
      %1563 = vmatprep.mubr.f32.mxu0 0.0
      %1564 = vmatmul.mubr.f32.gmra.mrb[0].mxu0 %v1194
      %v1565 = vpop.f32.mrb[0].mxu0
      %v1566 = vadd.f32 %v1019, %v1565
      %v1567 = vpop.f32.mrb[0].mxu0
      %1568 = vmatprep.mubr.f32.mxu0 0.0
      %1569 = vmatmul.mubr.f32.gmra.mrb[0].mxu0 %v1197
      %v1570 = vpop.f32.mrb[0].mxu0
      %v1571 = vadd.f32 %v1019, %v1570
      %v1572 = vpop.f32.mrb[0].mxu0
      %1573 = vmatprep.mubr.f32.mxu0 0.0
      %1574 = vmatmul.mubr.f32.gmra.mrb[0].mxu0 %v1200
      %v1575 = vpop.f32.mrb[0].mxu0
      %v1576 = vadd.f32 %v1019, %v1575
      %v1577 = vpop.f32.mrb[0].mxu0
      %1578 = vmatprep.mubr.f32.mxu0 0.0
      %1579 = vmatmul.mubr.f32.gmra.mrb[0].mxu0 %v1203
      %v1580 = vpop.f32.mrb[0].mxu0
      %v1581 = vadd.f32 %v1019, %v1580
      %v1582 = vpop.f32.mrb[0].mxu0
      %1583 = vmatprep.mubr.f32.mxu0 0.0
      %1584 = vmatmul.mubr.f32.gmra.mrb[0].mxu0 %v1206
      %v1585 = vpop.f32.mrb[0].mxu0
      %v1586 = vadd.f32 %v1019, %v1585
      %v1587 = vpop.f32.mrb[0].mxu0
      %1588 = vmatprep.mubr.f32.mxu0 0.0
      %1589 = vmatmul.mubr.f32.gmra.mrb[0].mxu0 %v1209
      %v1590 = vpop.f32.mrb[0].mxu0
      %v1591 = vadd.f32 %v1019, %v1590
      %v1592 = vpop.f32.mrb[0].mxu0
      %1593 = vmatprep.mubr.f32.mxu0 0.0
      %1594 = vmatmul.mubr.f32.gmra.mrb[0].mxu0 %v1212
      %v1595 = vpop.f32.mrb[0].mxu0
      %v1596 = vadd.f32 %v1019, %v1595
      %v1597 = vpop.f32.mrb[0].mxu0
      %1598 = vdwg.mxu0
      %v1599 = vmax.f32 %v1281, 0.0
      %v1600 = vmax.f32 %v1286, 0.0
      %v1601 = vmax.f32 %v1291, 0.0
      %v1602 = vmax.f32 %v1296, 0.0
      %v1603 = vmax.f32 %v1301, 0.0
      %v1604 = vmax.f32 %v1306, 0.0
      %v1605 = vmax.f32 %v1311, 0.0
      %v1606 = vmax.f32 %v1316, 0.0
      %v1607 = vmax.f32 %v1321, 0.0
      %v1608 = vmax.f32 %v1326, 0.0
      %v1609 = vmax.f32 %v1331, 0.0
      %v1610 = vmax.f32 %v1336, 0.0
      %v1611 = vmax.f32 %v1341, 0.0
      %v1612 = vmax.f32 %v1346, 0.0
      %v1613 = vmax.f32 %v1351, 0.0
      %v1614 = vmax.f32 %v1356, 0.0
      %v1615 = vmax.f32 %v1361, 0.0
      %v1616 = vmax.f32 %v1366, 0.0
      %v1617 = vmax.f32 %v1371, 0.0
      %v1618 = vmax.f32 %v1376, 0.0
      %v1619 = vmax.f32 %v1381, 0.0
      %v1620 = vmax.f32 %v1386, 0.0
      %v1621 = vmax.f32 %v1391, 0.0
      %v1622 = vmax.f32 %v1396, 0.0
      %v1623 = vmax.f32 %v1401, 0.0
      %v1624 = vmax.f32 %v1406, 0.0
      %v1625 = vmax.f32 %v1411, 0.0
      %v1626 = vmax.f32 %v1416, 0.0
      %v1627 = vmax.f32 %v1421, 0.0
      %v1628 = vmax.f32 %v1426, 0.0
      %v1629 = vmax.f32 %v1431, 0.0
      %v1630 = vmax.f32 %v1436, 0.0
      %v1631 = vmax.f32 %v1441, 0.0
      %v1632 = vmax.f32 %v1446, 0.0
      %v1633 = vmax.f32 %v1451, 0.0
      %v1634 = vmax.f32 %v1456, 0.0
      %v1635 = vmax.f32 %v1461, 0.0
      %v1636 = vmax.f32 %v1466, 0.0
      %v1637 = vmax.f32 %v1471, 0.0
      %v1638 = vmax.f32 %v1476, 0.0
      %v1639 = vmax.f32 %v1481, 0.0
      %v1640 = vmax.f32 %v1486, 0.0
      %v1641 = vmax.f32 %v1491, 0.0
      %v1642 = vmax.f32 %v1496, 0.0
      %v1643 = vmax.f32 %v1501, 0.0
      %v1644 = vmax.f32 %v1506, 0.0
      %v1645 = vmax.f32 %v1511, 0.0
      %v1646 = vmax.f32 %v1516, 0.0
      %v1647 = vmax.f32 %v1521, 0.0
      %v1648 = vmax.f32 %v1526, 0.0
      %v1649 = vmax.f32 %v1531, 0.0
      %v1650 = vmax.f32 %v1536, 0.0
      %v1651 = vmax.f32 %v1541, 0.0
      %v1652 = vmax.f32 %v1546, 0.0
      %v1653 = vmax.f32 %v1551, 0.0
      %v1654 = vmax.f32 %v1556, 0.0
      %v1655 = vmax.f32 %v1561, 0.0
      %v1656 = vmax.f32 %v1566, 0.0
      %v1657 = vmax.f32 %v1571, 0.0
      %v1658 = vmax.f32 %v1576, 0.0
      %v1659 = vmax.f32 %v1581, 0.0
      %v1660 = vmax.f32 %v1586, 0.0
      %v1661 = vmax.f32 %v1591, 0.0
      %v1662 = vmax.f32 %v1596, 0.0
      %v1663 = vld [vmem:[%s5] sm:$0xff]
      %v1664 = vld [vmem:[%s5 + $0x8] sm:$0xff]
      %v1665 = vld [vmem:[%s5 + $0x10] sm:$0xff]
      %v1666 = vld [vmem:[%s5 + $0x18] sm:$0xff]
      %v1667 = vld [vmem:[%s5 + $0x20] sm:$0xff]
      %v1668 = vld [vmem:[%s5 + $0x28] sm:$0xff]
      %v1669 = vld [vmem:[%s5 + $0x30] sm:$0xff]
      %v1670 = vld [vmem:[%s5 + $0x38] sm:$0xff]
      %v1671 = vld [vmem:[%s6] sm:$0x1]
      %v1673 = vlaneseq
      %v1674 = vshrl.u32 %v1673, 7
      %v1675 = vsub.s32 0, %v1674
      %v1676 = vrot.slane %v1671, %v1675
      %v1679 = vsel %vm1021, %v1599, 0
      %v1682 = vsel %vm1021, %v1600, 0
      %v1685 = vsel %vm1021, %v1601, 0
      %v1688 = vsel %vm1021, %v1602, 0
      %v1691 = vsel %vm1021, %v1603, 0
      %v1694 = vsel %vm1021, %v1604, 0
      %v1697 = vsel %vm1021, %v1605, 0
      %v1700 = vsel %vm1021, %v1606, 0
      %v1703 = vsel %vm1021, %v1607, 0
      %v1706 = vsel %vm1021, %v1608, 0
      %v1709 = vsel %vm1021, %v1609, 0
      %v1712 = vsel %vm1021, %v1610, 0
      %v1715 = vsel %vm1021, %v1611, 0
      %v1718 = vsel %vm1021, %v1612, 0
      %v1721 = vsel %vm1021, %v1613, 0
      %v1724 = vsel %vm1021, %v1614, 0
      %v1727 = vsel %vm1021, %v1615, 0
      %v1730 = vsel %vm1021, %v1616, 0
      %v1733 = vsel %vm1021, %v1617, 0
      %v1736 = vsel %vm1021, %v1618, 0
      %v1739 = vsel %vm1021, %v1619, 0
      %v1742 = vsel %vm1021, %v1620, 0
      %v1745 = vsel %vm1021, %v1621, 0
      %v1748 = vsel %vm1021, %v1622, 0
      %v1751 = vsel %vm1021, %v1623, 0
      %v1754 = vsel %vm1021, %v1624, 0
      %v1757 = vsel %vm1021, %v1625, 0
      %v1760 = vsel %vm1021, %v1626, 0
      %v1763 = vsel %vm1021, %v1627, 0
      %v1766 = vsel %vm1021, %v1628, 0
      %v1769 = vsel %vm1021, %v1629, 0
      %v1772 = vsel %vm1021, %v1630, 0
      %v1775 = vsel %vm1021, %v1631, 0
      %v1778 = vsel %vm1021, %v1632, 0
      %v1781 = vsel %vm1021, %v1633, 0
      %v1784 = vsel %vm1021, %v1634, 0
      %v1787 = vsel %vm1021, %v1635, 0
      %v1790 = vsel %vm1021, %v1636, 0
      %v1793 = vsel %vm1021, %v1637, 0
      %v1796 = vsel %vm1021, %v1638, 0
      %v1799 = vsel %vm1021, %v1639, 0
      %v1802 = vsel %vm1021, %v1640, 0
      %v1805 = vsel %vm1021, %v1641, 0
      %v1808 = vsel %vm1021, %v1642, 0
      %v1811 = vsel %vm1021, %v1643, 0
      %v1814 = vsel %vm1021, %v1644, 0
      %v1817 = vsel %vm1021, %v1645, 0
      %v1820 = vsel %vm1021, %v1646, 0
      %v1823 = vsel %vm1021, %v1647, 0
      %v1826 = vsel %vm1021, %v1648, 0
      %v1829 = vsel %vm1021, %v1649, 0
      %v1832 = vsel %vm1021, %v1650, 0
      %v1835 = vsel %vm1021, %v1651, 0
      %v1838 = vsel %vm1021, %v1652, 0
      %v1841 = vsel %vm1021, %v1653, 0
      %v1844 = vsel %vm1021, %v1654, 0
      %v1847 = vsel %vm1021, %v1655, 0
      %v1850 = vsel %vm1021, %v1656, 0
      %v1853 = vsel %vm1021, %v1657, 0
      %v1856 = vsel %vm1021, %v1658, 0
      %v1859 = vsel %vm1021, %v1659, 0
      %v1862 = vsel %vm1021, %v1660, 0
      %v1865 = vsel %vm1021, %v1661, 0
      %v1868 = vsel %vm1021, %v1662, 0
      %1870 = vmatprep.subr.mxu0 0.0
      %1871 = vmatpush1.msra.mxu0 %v1663
      %1872 = vmatprep.subr.mxu0 0.0
      %1873 = vmatpush1.msra.mxu0 %v1664
      %1874 = vmatprep.subr.mxu0 0.0
      %1875 = vmatpush1.msra.mxu0 %v1665
      %1876 = vmatprep.subr.mxu0 0.0
      %1877 = vmatpush1.msra.mxu0 %v1666
      %1878 = vmatprep.subr.mxu0 0.0
      %1879 = vmatpush1.msra.mxu0 %v1667
      %1880 = vmatprep.subr.mxu0 0.0
      %1881 = vmatpush1.msra.mxu0 %v1668
      %1882 = vmatprep.subr.mxu0 0.0
      %1883 = vmatpush1.msra.mxu0 %v1669
      %1884 = vmatprep.subr.mxu0 0.0
      %1885 = vmatpush1.msra.mxu0 %v1670
      %1886 = vmatprep.subr.mxu0 0.0
      %1887 = vmatpush1.msra.mxu0 0.0
      %1888 = vmatprep.subr.mxu0 0.0
      %1889 = vmatpush1.msra.mxu0 0.0
      %1890 = vmatprep.subr.mxu0 0.0
      %1891 = vmatpush1.msra.mxu0 0.0
      %1892 = vmatprep.subr.mxu0 0.0
      %1893 = vmatpush1.msra.mxu0 0.0
      %1894 = vmatprep.subr.mxu0 0.0
      %1895 = vmatpush1.msra.mxu0 0.0
      %1896 = vmatprep.subr.mxu0 0.0
      %1897 = vmatpush1.msra.mxu0 0.0
      %1898 = vmatprep.subr.mxu0 0.0
      %1899 = vmatpush1.msra.mxu0 0.0
      %1900 = vmatprep.subr.mxu0 0.0
      %1901 = vmatpush1.msra.mxu0 0.0
      %1902 = vmatprep.subr.mxu0 0.0
      %1903 = vmatpush1.msra.mxu0 0.0
      %1904 = vmatprep.subr.mxu0 0.0
      %1905 = vmatpush1.msra.mxu0 0.0
      %1906 = vmatprep.subr.mxu0 0.0
      %1907 = vmatpush1.msra.mxu0 0.0
      %1908 = vmatprep.subr.mxu0 0.0
      %1909 = vmatpush1.msra.mxu0 0.0
      %1910 = vmatprep.subr.mxu0 0.0
      %1911 = vmatpush1.msra.mxu0 0.0
      %1912 = vmatprep.subr.mxu0 0.0
      %1913 = vmatpush1.msra.mxu0 0.0
      %1914 = vmatprep.subr.mxu0 0.0
      %1915 = vmatpush1.msra.mxu0 0.0
      %1916 = vmatprep.subr.mxu0 0.0
      %1917 = vmatpush1.msra.mxu0 0.0
      %1918 = vmatprep.subr.mxu0 0.0
      %1919 = vmatpush1.msra.mxu0 0.0
      %1920 = vmatprep.subr.mxu0 0.0
      %1921 = vmatpush1.msra.mxu0 0.0
      %1922 = vmatprep.subr.mxu0 0.0
      %1923 = vmatpush1.msra.mxu0 0.0
      %1924 = vmatprep.subr.mxu0 0.0
      %1925 = vmatpush1.msra.mxu0 0.0
      %1926 = vmatprep.subr.mxu0 0.0
      %1927 = vmatpush1.msra.mxu0 0.0
      %1928 = vmatprep.subr.mxu0 0.0
      %1929 = vmatpush1.msra.mxu0 0.0
      %1930 = vmatprep.subr.mxu0 0.0
      %1931 = vmatpush1.msra.mxu0 0.0
      %1932 = vmatprep.subr.mxu0 0.0
      %1933 = vmatpush1.msra.mxu0 0.0
      %1934 = vmatprep.mubr.f32.mxu0 0.0
      %1935 = vmatmul.mubr.f32.gmra.mrb[0].mxu0 %v1679
      %v1936 = vpop.f32.mrb[0].mxu0
      %v1937 = vadd.f32 %v1676, %v1936
      %v1938 = vpop.f32.mrb[0].mxu0
      %1939 = vmatprep.mubr.f32.mxu0 0.0
      %1940 = vmatmul.mubr.f32.gmra.mrb[0].mxu0 %v1682
      %v1941 = vpop.f32.mrb[0].mxu0
      %v1942 = vadd.f32 %v1676, %v1941
      %v1943 = vpop.f32.mrb[0].mxu0
      %1944 = vmatprep.mubr.f32.mxu0 0.0
      %1945 = vmatmul.mubr.f32.gmra.mrb[0].mxu0 %v1685
      %v1946 = vpop.f32.mrb[0].mxu0
      %v1947 = vadd.f32 %v1676, %v1946
      %v1948 = vpop.f32.mrb[0].mxu0
      %1949 = vmatprep.mubr.f32.mxu0 0.0
      %1950 = vmatmul.mubr.f32.gmra.mrb[0].mxu0 %v1688
      %v1951 = vpop.f32.mrb[0].mxu0
      %v1952 = vadd.f32 %v1676, %v1951
      %v1953 = vpop.f32.mrb[0].mxu0
      %1954 = vmatprep.mubr.f32.mxu0 0.0
      %1955 = vmatmul.mubr.f32.gmra.mrb[0].mxu0 %v1691
      %v1956 = vpop.f32.mrb[0].mxu0
      %v1957 = vadd.f32 %v1676, %v1956
      %v1958 = vpop.f32.mrb[0].mxu0
      %1959 = vmatprep.mubr.f32.mxu0 0.0
      %1960 = vmatmul.mubr.f32.gmra.mrb[0].mxu0 %v1694
      %v1961 = vpop.f32.mrb[0].mxu0
      %v1962 = vadd.f32 %v1676, %v1961
      %v1963 = vpop.f32.mrb[0].mxu0
      %1964 = vmatprep.mubr.f32.mxu0 0.0
      %1965 = vmatmul.mubr.f32.gmra.mrb[0].mxu0 %v1697
      %v1966 = vpop.f32.mrb[0].mxu0
      %v1967 = vadd.f32 %v1676, %v1966
      %v1968 = vpop.f32.mrb[0].mxu0
      %1969 = vmatprep.mubr.f32.mxu0 0.0
      %1970 = vmatmul.mubr.f32.gmra.mrb[0].mxu0 %v1700
      %v1971 = vpop.f32.mrb[0].mxu0
      %v1972 = vadd.f32 %v1676, %v1971
      %v1973 = vpop.f32.mrb[0].mxu0
      %1974 = vmatprep.mubr.f32.mxu0 0.0
      %1975 = vmatmul.mubr.f32.gmra.mrb[0].mxu0 %v1703
      %v1976 = vpop.f32.mrb[0].mxu0
      %v1977 = vadd.f32 %v1676, %v1976
      %v1978 = vpop.f32.mrb[0].mxu0
      %1979 = vmatprep.mubr.f32.mxu0 0.0
      %1980 = vmatmul.mubr.f32.gmra.mrb[0].mxu0 %v1706
      %v1981 = vpop.f32.mrb[0].mxu0
      %v1982 = vadd.f32 %v1676, %v1981
      %v1983 = vpop.f32.mrb[0].mxu0
      %1984 = vmatprep.mubr.f32.mxu0 0.0
      %1985 = vmatmul.mubr.f32.gmra.mrb[0].mxu0 %v1709
      %v1986 = vpop.f32.mrb[0].mxu0
      %v1987 = vadd.f32 %v1676, %v1986
      %v1988 = vpop.f32.mrb[0].mxu0
      %1989 = vmatprep.mubr.f32.mxu0 0.0
      %1990 = vmatmul.mubr.f32.gmra.mrb[0].mxu0 %v1712
      %v1991 = vpop.f32.mrb[0].mxu0
      %v1992 = vadd.f32 %v1676, %v1991
      %v1993 = vpop.f32.mrb[0].mxu0
      %1994 = vmatprep.mubr.f32.mxu0 0.0
      %1995 = vmatmul.mubr.f32.gmra.mrb[0].mxu0 %v1715
      %v1996 = vpop.f32.mrb[0].mxu0
      %v1997 = vadd.f32 %v1676, %v1996
      %v1998 = vpop.f32.mrb[0].mxu0
      %1999 = vmatprep.mubr.f32.mxu0 0.0
      %2000 = vmatmul.mubr.f32.gmra.mrb[0].mxu0 %v1718
      %v2001 = vpop.f32.mrb[0].mxu0
      %v2002 = vadd.f32 %v1676, %v2001
      %v2003 = vpop.f32.mrb[0].mxu0
      %2004 = vmatprep.mubr.f32.mxu0 0.0
      %2005 = vmatmul.mubr.f32.gmra.mrb[0].mxu0 %v1721
      %v2006 = vpop.f32.mrb[0].mxu0
      %v2007 = vadd.f32 %v1676, %v2006
      %v2008 = vpop.f32.mrb[0].mxu0
      %2009 = vmatprep.mubr.f32.mxu0 0.0
      %2010 = vmatmul.mubr.f32.gmra.mrb[0].mxu0 %v1724
      %v2011 = vpop.f32.mrb[0].mxu0
      %v2012 = vadd.f32 %v1676, %v2011
      %v2013 = vpop.f32.mrb[0].mxu0
      %2014 = vmatprep.mubr.f32.mxu0 0.0
      %2015 = vmatmul.mubr.f32.gmra.mrb[0].mxu0 %v1727
      %v2016 = vpop.f32.mrb[0].mxu0
      %v2017 = vadd.f32 %v1676, %v2016
      %v2018 = vpop.f32.mrb[0].mxu0
      %2019 = vmatprep.mubr.f32.mxu0 0.0
      %2020 = vmatmul.mubr.f32.gmra.mrb[0].mxu0 %v1730
      %v2021 = vpop.f32.mrb[0].mxu0
      %v2022 = vadd.f32 %v1676, %v2021
      %v2023 = vpop.f32.mrb[0].mxu0
      %2024 = vmatprep.mubr.f32.mxu0 0.0
      %2025 = vmatmul.mubr.f32.gmra.mrb[0].mxu0 %v1733
      %v2026 = vpop.f32.mrb[0].mxu0
      %v2027 = vadd.f32 %v1676, %v2026
      %v2028 = vpop.f32.mrb[0].mxu0
      %2029 = vmatprep.mubr.f32.mxu0 0.0
      %2030 = vmatmul.mubr.f32.gmra.mrb[0].mxu0 %v1736
      %v2031 = vpop.f32.mrb[0].mxu0
      %v2032 = vadd.f32 %v1676, %v2031
      %v2033 = vpop.f32.mrb[0].mxu0
      %2034 = vmatprep.mubr.f32.mxu0 0.0
      %2035 = vmatmul.mubr.f32.gmra.mrb[0].mxu0 %v1739
      %v2036 = vpop.f32.mrb[0].mxu0
      %v2037 = vadd.f32 %v1676, %v2036
      %v2038 = vpop.f32.mrb[0].mxu0
      %2039 = vmatprep.mubr.f32.mxu0 0.0
      %2040 = vmatmul.mubr.f32.gmra.mrb[0].mxu0 %v1742
      %v2041 = vpop.f32.mrb[0].mxu0
      %v2042 = vadd.f32 %v1676, %v2041
      %v2043 = vpop.f32.mrb[0].mxu0
      %2044 = vmatprep.mubr.f32.mxu0 0.0
      %2045 = vmatmul.mubr.f32.gmra.mrb[0].mxu0 %v1745
      %v2046 = vpop.f32.mrb[0].mxu0
      %v2047 = vadd.f32 %v1676, %v2046
      %v2048 = vpop.f32.mrb[0].mxu0
      %2049 = vmatprep.mubr.f32.mxu0 0.0
      %2050 = vmatmul.mubr.f32.gmra.mrb[0].mxu0 %v1748
      %v2051 = vpop.f32.mrb[0].mxu0
      %v2052 = vadd.f32 %v1676, %v2051
      %v2053 = vpop.f32.mrb[0].mxu0
      %2054 = vmatprep.mubr.f32.mxu0 0.0
      %2055 = vmatmul.mubr.f32.gmra.mrb[0].mxu0 %v1751
      %v2056 = vpop.f32.mrb[0].mxu0
      %v2057 = vadd.f32 %v1676, %v2056
      %v2058 = vpop.f32.mrb[0].mxu0
      %2059 = vmatprep.mubr.f32.mxu0 0.0
      %2060 = vmatmul.mubr.f32.gmra.mrb[0].mxu0 %v1754
      %v2061 = vpop.f32.mrb[0].mxu0
      %v2062 = vadd.f32 %v1676, %v2061
      %v2063 = vpop.f32.mrb[0].mxu0
      %2064 = vmatprep.mubr.f32.mxu0 0.0
      %2065 = vmatmul.mubr.f32.gmra.mrb[0].mxu0 %v1757
      %v2066 = vpop.f32.mrb[0].mxu0
      %v2067 = vadd.f32 %v1676, %v2066
      %v2068 = vpop.f32.mrb[0].mxu0
      %2069 = vmatprep.mubr.f32.mxu0 0.0
      %2070 = vmatmul.mubr.f32.gmra.mrb[0].mxu0 %v1760
      %v2071 = vpop.f32.mrb[0].mxu0
      %v2072 = vadd.f32 %v1676, %v2071
      %v2073 = vpop.f32.mrb[0].mxu0
      %2074 = vmatprep.mubr.f32.mxu0 0.0
      %2075 = vmatmul.mubr.f32.gmra.mrb[0].mxu0 %v1763
      %v2076 = vpop.f32.mrb[0].mxu0
      %v2077 = vadd.f32 %v1676, %v2076
      %v2078 = vpop.f32.mrb[0].mxu0
      %2079 = vmatprep.mubr.f32.mxu0 0.0
      %2080 = vmatmul.mubr.f32.gmra.mrb[0].mxu0 %v1766
      %v2081 = vpop.f32.mrb[0].mxu0
      %v2082 = vadd.f32 %v1676, %v2081
      %v2083 = vpop.f32.mrb[0].mxu0
      %2084 = vmatprep.mubr.f32.mxu0 0.0
      %2085 = vmatmul.mubr.f32.gmra.mrb[0].mxu0 %v1769
      %v2086 = vpop.f32.mrb[0].mxu0
      %v2087 = vadd.f32 %v1676, %v2086
      %v2088 = vpop.f32.mrb[0].mxu0
      %2089 = vmatprep.mubr.f32.mxu0 0.0
      %2090 = vmatmul.mubr.f32.gmra.mrb[0].mxu0 %v1772
      %v2091 = vpop.f32.mrb[0].mxu0
      %v2092 = vadd.f32 %v1676, %v2091
      %v2093 = vpop.f32.mrb[0].mxu0
      %2094 = vmatprep.mubr.f32.mxu0 0.0
      %2095 = vmatmul.mubr.f32.gmra.mrb[0].mxu0 %v1775
      %v2096 = vpop.f32.mrb[0].mxu0
      %v2097 = vadd.f32 %v1676, %v2096
      %v2098 = vpop.f32.mrb[0].mxu0
      %2099 = vmatprep.mubr.f32.mxu0 0.0
      %2100 = vmatmul.mubr.f32.gmra.mrb[0].mxu0 %v1778
      %v2101 = vpop.f32.mrb[0].mxu0
      %v2102 = vadd.f32 %v1676, %v2101
      %v2103 = vpop.f32.mrb[0].mxu0
      %2104 = vmatprep.mubr.f32.mxu0 0.0
      %2105 = vmatmul.mubr.f32.gmra.mrb[0].mxu0 %v1781
      %v2106 = vpop.f32.mrb[0].mxu0
      %v2107 = vadd.f32 %v1676, %v2106
      %v2108 = vpop.f32.mrb[0].mxu0
      %2109 = vmatprep.mubr.f32.mxu0 0.0
      %2110 = vmatmul.mubr.f32.gmra.mrb[0].mxu0 %v1784
      %v2111 = vpop.f32.mrb[0].mxu0
      %v2112 = vadd.f32 %v1676, %v2111
      %v2113 = vpop.f32.mrb[0].mxu0
      %2114 = vmatprep.mubr.f32.mxu0 0.0
      %2115 = vmatmul.mubr.f32.gmra.mrb[0].mxu0 %v1787
      %v2116 = vpop.f32.mrb[0].mxu0
      %v2117 = vadd.f32 %v1676, %v2116
      %v2118 = vpop.f32.mrb[0].mxu0
      %2119 = vmatprep.mubr.f32.mxu0 0.0
      %2120 = vmatmul.mubr.f32.gmra.mrb[0].mxu0 %v1790
      %v2121 = vpop.f32.mrb[0].mxu0
      %v2122 = vadd.f32 %v1676, %v2121
      %v2123 = vpop.f32.mrb[0].mxu0
      %2124 = vmatprep.mubr.f32.mxu0 0.0
      %2125 = vmatmul.mubr.f32.gmra.mrb[0].mxu0 %v1793
      %v2126 = vpop.f32.mrb[0].mxu0
      %v2127 = vadd.f32 %v1676, %v2126
      %v2128 = vpop.f32.mrb[0].mxu0
      %2129 = vmatprep.mubr.f32.mxu0 0.0
      %2130 = vmatmul.mubr.f32.gmra.mrb[0].mxu0 %v1796
      %v2131 = vpop.f32.mrb[0].mxu0
      %v2132 = vadd.f32 %v1676, %v2131
      %v2133 = vpop.f32.mrb[0].mxu0
      %2134 = vmatprep.mubr.f32.mxu0 0.0
      %2135 = vmatmul.mubr.f32.gmra.mrb[0].mxu0 %v1799
      %v2136 = vpop.f32.mrb[0].mxu0
      %v2137 = vadd.f32 %v1676, %v2136
      %v2138 = vpop.f32.mrb[0].mxu0
      %2139 = vmatprep.mubr.f32.mxu0 0.0
      %2140 = vmatmul.mubr.f32.gmra.mrb[0].mxu0 %v1802
      %v2141 = vpop.f32.mrb[0].mxu0
      %v2142 = vadd.f32 %v1676, %v2141
      %v2143 = vpop.f32.mrb[0].mxu0
      %2144 = vmatprep.mubr.f32.mxu0 0.0
      %2145 = vmatmul.mubr.f32.gmra.mrb[0].mxu0 %v1805
      %v2146 = vpop.f32.mrb[0].mxu0
      %v2147 = vadd.f32 %v1676, %v2146
      %v2148 = vpop.f32.mrb[0].mxu0
      %2149 = vmatprep.mubr.f32.mxu0 0.0
      %2150 = vmatmul.mubr.f32.gmra.mrb[0].mxu0 %v1808
      %v2151 = vpop.f32.mrb[0].mxu0
      %v2152 = vadd.f32 %v1676, %v2151
      %v2153 = vpop.f32.mrb[0].mxu0
      %2154 = vmatprep.mubr.f32.mxu0 0.0
      %2155 = vmatmul.mubr.f32.gmra.mrb[0].mxu0 %v1811
      %v2156 = vpop.f32.mrb[0].mxu0
      %v2157 = vadd.f32 %v1676, %v2156
      %v2158 = vpop.f32.mrb[0].mxu0
      %2159 = vmatprep.mubr.f32.mxu0 0.0
      %2160 = vmatmul.mubr.f32.gmra.mrb[0].mxu0 %v1814
      %v2161 = vpop.f32.mrb[0].mxu0
      %v2162 = vadd.f32 %v1676, %v2161
      %v2163 = vpop.f32.mrb[0].mxu0
      %2164 = vmatprep.mubr.f32.mxu0 0.0
      %2165 = vmatmul.mubr.f32.gmra.mrb[0].mxu0 %v1817
      %v2166 = vpop.f32.mrb[0].mxu0
      %v2167 = vadd.f32 %v1676, %v2166
      %v2168 = vpop.f32.mrb[0].mxu0
      %2169 = vmatprep.mubr.f32.mxu0 0.0
      %2170 = vmatmul.mubr.f32.gmra.mrb[0].mxu0 %v1820
      %v2171 = vpop.f32.mrb[0].mxu0
      %v2172 = vadd.f32 %v1676, %v2171
      %v2173 = vpop.f32.mrb[0].mxu0
      %2174 = vmatprep.mubr.f32.mxu0 0.0
      %2175 = vmatmul.mubr.f32.gmra.mrb[0].mxu0 %v1823
      %v2176 = vpop.f32.mrb[0].mxu0
      %v2177 = vadd.f32 %v1676, %v2176
      %v2178 = vpop.f32.mrb[0].mxu0
      %2179 = vmatprep.mubr.f32.mxu0 0.0
      %2180 = vmatmul.mubr.f32.gmra.mrb[0].mxu0 %v1826
      %v2181 = vpop.f32.mrb[0].mxu0
      %v2182 = vadd.f32 %v1676, %v2181
      %v2183 = vpop.f32.mrb[0].mxu0
      %2184 = vmatprep.mubr.f32.mxu0 0.0
      %2185 = vmatmul.mubr.f32.gmra.mrb[0].mxu0 %v1829
      %v2186 = vpop.f32.mrb[0].mxu0
      %v2187 = vadd.f32 %v1676, %v2186
      %v2188 = vpop.f32.mrb[0].mxu0
      %2189 = vmatprep.mubr.f32.mxu0 0.0
      %2190 = vmatmul.mubr.f32.gmra.mrb[0].mxu0 %v1832
      %v2191 = vpop.f32.mrb[0].mxu0
      %v2192 = vadd.f32 %v1676, %v2191
      %v2193 = vpop.f32.mrb[0].mxu0
      %2194 = vmatprep.mubr.f32.mxu0 0.0
      %2195 = vmatmul.mubr.f32.gmra.mrb[0].mxu0 %v1835
      %v2196 = vpop.f32.mrb[0].mxu0
      %v2197 = vadd.f32 %v1676, %v2196
      %v2198 = vpop.f32.mrb[0].mxu0
      %2199 = vmatprep.mubr.f32.mxu0 0.0
      %2200 = vmatmul.mubr.f32.gmra.mrb[0].mxu0 %v1838
      %v2201 = vpop.f32.mrb[0].mxu0
      %v2202 = vadd.f32 %v1676, %v2201
      %v2203 = vpop.f32.mrb[0].mxu0
      %2204 = vmatprep.mubr.f32.mxu0 0.0
      %2205 = vmatmul.mubr.f32.gmra.mrb[0].mxu0 %v1841
      %v2206 = vpop.f32.mrb[0].mxu0
      %v2207 = vadd.f32 %v1676, %v2206
      %v2208 = vpop.f32.mrb[0].mxu0
      %2209 = vmatprep.mubr.f32.mxu0 0.0
      %2210 = vmatmul.mubr.f32.gmra.mrb[0].mxu0 %v1844
      %v2211 = vpop.f32.mrb[0].mxu0
      %v2212 = vadd.f32 %v1676, %v2211
      %v2213 = vpop.f32.mrb[0].mxu0
      %2214 = vmatprep.mubr.f32.mxu0 0.0
      %2215 = vmatmul.mubr.f32.gmra.mrb[0].mxu0 %v1847
      %v2216 = vpop.f32.mrb[0].mxu0
      %v2217 = vadd.f32 %v1676, %v2216
      %v2218 = vpop.f32.mrb[0].mxu0
      %2219 = vmatprep.mubr.f32.mxu0 0.0
      %2220 = vmatmul.mubr.f32.gmra.mrb[0].mxu0 %v1850
      %v2221 = vpop.f32.mrb[0].mxu0
      %v2222 = vadd.f32 %v1676, %v2221
      %v2223 = vpop.f32.mrb[0].mxu0
      %2224 = vmatprep.mubr.f32.mxu0 0.0
      %2225 = vmatmul.mubr.f32.gmra.mrb[0].mxu0 %v1853
      %v2226 = vpop.f32.mrb[0].mxu0
      %v2227 = vadd.f32 %v1676, %v2226
      %v2228 = vpop.f32.mrb[0].mxu0
      %2229 = vmatprep.mubr.f32.mxu0 0.0
      %2230 = vmatmul.mubr.f32.gmra.mrb[0].mxu0 %v1856
      %v2231 = vpop.f32.mrb[0].mxu0
      %v2232 = vadd.f32 %v1676, %v2231
      %v2233 = vpop.f32.mrb[0].mxu0
      %2234 = vmatprep.mubr.f32.mxu0 0.0
      %2235 = vmatmul.mubr.f32.gmra.mrb[0].mxu0 %v1859
      %v2236 = vpop.f32.mrb[0].mxu0
      %v2237 = vadd.f32 %v1676, %v2236
      %v2238 = vpop.f32.mrb[0].mxu0
      %2239 = vmatprep.mubr.f32.mxu0 0.0
      %2240 = vmatmul.mubr.f32.gmra.mrb[0].mxu0 %v1862
      %v2241 = vpop.f32.mrb[0].mxu0
      %v2242 = vadd.f32 %v1676, %v2241
      %v2243 = vpop.f32.mrb[0].mxu0
      %2244 = vmatprep.mubr.f32.mxu0 0.0
      %2245 = vmatmul.mubr.f32.gmra.mrb[0].mxu0 %v1865
      %v2246 = vpop.f32.mrb[0].mxu0
      %v2247 = vadd.f32 %v1676, %v2246
      %v2248 = vpop.f32.mrb[0].mxu0
      %2249 = vmatprep.mubr.f32.mxu0 0.0
      %2250 = vmatmul.mubr.f32.gmra.mrb[0].mxu0 %v1868
      %v2251 = vpop.f32.mrb[0].mxu0
      %v2252 = vadd.f32 %v1676, %v2251
      %v2253 = vpop.f32.mrb[0].mxu0
      %2254 = vdwg.mxu0
      %vm2255 = vcmask 23552
      %2256 = vst.msk [vmem:[%s280] sm:$0xff] %vm2255, %v1937
      %2257 = vst.msk [vmem:[%s280 + $0x8] sm:$0xff] %vm2255, %v1942
      %2258 = vst.msk [vmem:[%s280 + $0x10] sm:$0xff] %vm2255, %v1947
      %2259 = vst.msk [vmem:[%s280 + $0x18] sm:$0xff] %vm2255, %v1952
      %2260 = vst.msk [vmem:[%s280 + $0x20] sm:$0xff] %vm2255, %v1957
      %2261 = vst.msk [vmem:[%s280 + $0x28] sm:$0xff] %vm2255, %v1962
      %2262 = vst.msk [vmem:[%s280 + $0x30] sm:$0xff] %vm2255, %v1967
      %2263 = vst.msk [vmem:[%s280 + $0x38] sm:$0xff] %vm2255, %v1972
      %2264 = vst.msk [vmem:[%s280 + $0x40] sm:$0xff] %vm2255, %v1977
      %2265 = vst.msk [vmem:[%s280 + $0x48] sm:$0xff] %vm2255, %v1982
      %2266 = vst.msk [vmem:[%s280 + $0x50] sm:$0xff] %vm2255, %v1987
      %2267 = vst.msk [vmem:[%s280 + $0x58] sm:$0xff] %vm2255, %v1992
      %2268 = vst.msk [vmem:[%s280 + $0x60] sm:$0xff] %vm2255, %v1997
      %2269 = vst.msk [vmem:[%s280 + $0x68] sm:$0xff] %vm2255, %v2002
      %2270 = vst.msk [vmem:[%s280 + $0x70] sm:$0xff] %vm2255, %v2007
      %2271 = vst.msk [vmem:[%s280 + $0x78] sm:$0xff] %vm2255, %v2012
      %2272 = vst.msk [vmem:[%s280 + $0x80] sm:$0xff] %vm2255, %v2017
      %2273 = vst.msk [vmem:[%s280 + $0x88] sm:$0xff] %vm2255, %v2022
      %2274 = vst.msk [vmem:[%s280 + $0x90] sm:$0xff] %vm2255, %v2027
      %2275 = vst.msk [vmem:[%s280 + $0x98] sm:$0xff] %vm2255, %v2032
      %2276 = vst.msk [vmem:[%s280 + $0xa0] sm:$0xff] %vm2255, %v2037
      %2277 = vst.msk [vmem:[%s280 + $0xa8] sm:$0xff] %vm2255, %v2042
      %2278 = vst.msk [vmem:[%s280 + $0xb0] sm:$0xff] %vm2255, %v2047
      %2279 = vst.msk [vmem:[%s280 + $0xb8] sm:$0xff] %vm2255, %v2052
      %2280 = vst.msk [vmem:[%s280 + $0xc0] sm:$0xff] %vm2255, %v2057
      %2281 = vst.msk [vmem:[%s280 + $0xc8] sm:$0xff] %vm2255, %v2062
      %2282 = vst.msk [vmem:[%s280 + $0xd0] sm:$0xff] %vm2255, %v2067
      %2283 = vst.msk [vmem:[%s280 + $0xd8] sm:$0xff] %vm2255, %v2072
      %2284 = vst.msk [vmem:[%s280 + $0xe0] sm:$0xff] %vm2255, %v2077
      %2285 = vst.msk [vmem:[%s280 + $0xe8] sm:$0xff] %vm2255, %v2082
      %2286 = vst.msk [vmem:[%s280 + $0xf0] sm:$0xff] %vm2255, %v2087
      %2287 = vst.msk [vmem:[%s280 + $0xf8] sm:$0xff] %vm2255, %v2092
      %2288 = vst.msk [vmem:[%s280 + $0x100] sm:$0xff] %vm2255, %v2097
      %2289 = vst.msk [vmem:[%s280 + $0x108] sm:$0xff] %vm2255, %v2102
      %2290 = vst.msk [vmem:[%s280 + $0x110] sm:$0xff] %vm2255, %v2107
      %2291 = vst.msk [vmem:[%s280 + $0x118] sm:$0xff] %vm2255, %v2112
      %2292 = vst.msk [vmem:[%s280 + $0x120] sm:$0xff] %vm2255, %v2117
      %2293 = vst.msk [vmem:[%s280 + $0x128] sm:$0xff] %vm2255, %v2122
      %2294 = vst.msk [vmem:[%s280 + $0x130] sm:$0xff] %vm2255, %v2127
      %2295 = vst.msk [vmem:[%s280 + $0x138] sm:$0xff] %vm2255, %v2132
      %2296 = vst.msk [vmem:[%s280 + $0x140] sm:$0xff] %vm2255, %v2137
      %2297 = vst.msk [vmem:[%s280 + $0x148] sm:$0xff] %vm2255, %v2142
      %2298 = vst.msk [vmem:[%s280 + $0x150] sm:$0xff] %vm2255, %v2147
      %2299 = vst.msk [vmem:[%s280 + $0x158] sm:$0xff] %vm2255, %v2152
      %2300 = vst.msk [vmem:[%s280 + $0x160] sm:$0xff] %vm2255, %v2157
      %2301 = vst.msk [vmem:[%s280 + $0x168] sm:$0xff] %vm2255, %v2162
      %2302 = vst.msk [vmem:[%s280 + $0x170] sm:$0xff] %vm2255, %v2167
      %2303 = vst.msk [vmem:[%s280 + $0x178] sm:$0xff] %vm2255, %v2172
      %2304 = vst.msk [vmem:[%s280 + $0x180] sm:$0xff] %vm2255, %v2177
      %2305 = vst.msk [vmem:[%s280 + $0x188] sm:$0xff] %vm2255, %v2182
      %2306 = vst.msk [vmem:[%s280 + $0x190] sm:$0xff] %vm2255, %v2187
      %2307 = vst.msk [vmem:[%s280 + $0x198] sm:$0xff] %vm2255, %v2192
      %2308 = vst.msk [vmem:[%s280 + $0x1a0] sm:$0xff] %vm2255, %v2197
      %2309 = vst.msk [vmem:[%s280 + $0x1a8] sm:$0xff] %vm2255, %v2202
      %2310 = vst.msk [vmem:[%s280 + $0x1b0] sm:$0xff] %vm2255, %v2207
      %2311 = vst.msk [vmem:[%s280 + $0x1b8] sm:$0xff] %vm2255, %v2212
      %2312 = vst.msk [vmem:[%s280 + $0x1c0] sm:$0xff] %vm2255, %v2217
      %2313 = vst.msk [vmem:[%s280 + $0x1c8] sm:$0xff] %vm2255, %v2222
      %2314 = vst.msk [vmem:[%s280 + $0x1d0] sm:$0xff] %vm2255, %v2227
      %2315 = vst.msk [vmem:[%s280 + $0x1d8] sm:$0xff] %vm2255, %v2232
      %2316 = vst.msk [vmem:[%s280 + $0x1e0] sm:$0xff] %vm2255, %v2237
      %2317 = vst.msk [vmem:[%s280 + $0x1e8] sm:$0xff] %vm2255, %v2242
      %2318 = vst.msk [vmem:[%s280 + $0x1f0] sm:$0xff] %vm2255, %v2247
      %2319 = vst.msk [vmem:[%s280 + $0x1f8] sm:$0xff] %vm2255, %v2252
      %s2320 = smul.u32 64, %s18
      %p2321 = scmp.lt.s32.totalorder %s2320, 255
      %s2322 = scalar_select %p2321, %s2320, 255
      %s2323 = smul.addr %s2322, 8
      %s2324 = scalar_lea.vmem %s7, %s2323
      // Predicated region
      $region49: #{tpu_custom_call.1} parent=47 // pred_check
        %p2325 = pneg %p188
      $region50: #{tpu_custom_call.1} parent=47 // pred_check_branch
        %2327 = sbr.rel (%p2325) target = $region52
      $region51: #{tpu_custom_call.1} parent=47 // pred_region
        %s2328 = smul.u32 64, %s18
      $region52: #{tpu_custom_call.1} parent=47 // pred_fallthru
        _
    $region48: #{tpu_custom_call.1} parent=5 // pred_fallthru
      _
    %p2329 = scmp.le.s32.totalorder 2, %s13
    // Predicated region
    $region53: #{tpu_custom_call.1} parent=5 // pred_check
      %p2330 = pneg %p2329
    $region54: #{tpu_custom_call.1} parent=5 // pred_check_branch
      %2332 = sbr.rel (%p2330) target = $region56
    $region55: #{tpu_custom_call.1} parent=5 // pred_region
      %s2333 = ssub.s32 %s13, 2
      // Predicated region
      $region57: #{tpu_custom_call.1} parent=55 // pred_check
        %p2334 = pneg %p194
      $region58: #{tpu_custom_call.1} parent=55 // pred_check_branch
        %2336 = sbr.rel (%p2334) target = $region60
      $region59: #{tpu_custom_call.1} parent=55 // pred_region
        %s2337 = smul.u32 64, %s19
        %p2338 = scmp.lt.s32.totalorder %s2337, 255
        %s2339 = scalar_select %p2338, %s2337, 255
        %s2340 = smul.addr %s2339, 8
        %s2341 = scalar_lea.vmem %s7, %s2340
      $region60: #{tpu_custom_call.1} parent=55 // pred_fallthru
        _
    $region56: #{tpu_custom_call.1} parent=5 // pred_fallthru
      _
  $region6: #{tpu_custom_call.1} parent=0 // loop_footer
    %s17 = sadd.s32 1, %s13
  $region7: #{tpu_custom_call.1} parent=0 // loop_footer_branch
    %12 = sbr.rel target = $region3
  $region8: #{tpu_custom_call.1} parent=0 // loop_exit
    _

</llo_original>
